<compile_context>
chip_gen: v7x
topology: tpu7x:2x2x1
jax: 0.10.0
libtpu: 0.0.40
codegen_flags: <defaults>
</compile_context>

<pallas_src>
import functools
import math

import jax
import jax.numpy as jnp
from jax.experimental import pallas as pl
from jax.experimental.pallas import tpu as pltpu


# ----------------------------------------------------------------------------
# Kernel
# ----------------------------------------------------------------------------

def cross_attn_kernel(x_ref, t_ref, wq_ref, bq_ref, wk_ref, bk_ref,
                      wv_ref, bv_ref, wo_ref, bo_ref, out_ref,
                      k_scr, v_scr, *, num_heads, head_dim):
    """One (batch, query-tile) grid point, channels-first / lane-dense on TQ.

    x_ref       : (1, C, TQ)  image feature tile (lane-dense on TQ)
    t_ref       : (1, E, S)   text embedding (feature-major), constant over q
    wq_ref      : (C, C)      pre-scaled by 1/sqrt(head_dim), activation dtype
    wk/wv_ref   : (C, E)      activation dtype
    wo_ref      : (C, C)      activation dtype
    b*_ref      : (C, 1)      f32 (added to the f32 accumulator)
    out_ref     : (1, C, TQ)
    k_scr/v_scr : (C, S)      persistent VMEM scratch, recomputed when q == 0
    """
    # ---- K/V projection: once per batch (q == 0), kept resident in VMEM. ----
    @pl.when(pl.program_id(1) == 0)
    def _():
        t = t_ref[0]                                                   # (E, S)
        k = jnp.dot(wk_ref[...], t, preferred_element_type=jnp.float32) + bk_ref[...]
        v = jnp.dot(wv_ref[...], t, preferred_element_type=jnp.float32) + bv_ref[...]
        k_scr[...] = k.astype(k_scr.dtype)
        v_scr[...] = v.astype(v_scr.dtype)

    x = x_ref[0]                                                       # (C, TQ)
    tq = x.shape[1]
    s = k_scr.shape[1]

    # Q^T = (scale * Wq) @ x + scale * bq  -> f32 accumulation on the MXU.
    qt = jnp.dot(wq_ref[...], x, preferred_element_type=jnp.float32) + bq_ref[...]

    # Split heads along the leading (channel) dim.  NOTE: head_dim should be a
    # multiple of 8 (ideally >= 64); smaller values force a sublane relayout
    # and underfeed the MXU contraction (still correct, just slower).
    # Downcast the *query* operand to the activation dtype rather than
    # upcasting K/V to f32 (bf16 operands run at the MXU headline rate).
    q3 = qt.reshape(num_heads, head_dim, tq).astype(x.dtype)           # (H, D, TQ)
    k3 = k_scr[...].reshape(num_heads, head_dim, s)                    # (H, D, S)
    v3 = v_scr[...].reshape(num_heads, head_dim, s)                    # (H, D, S)

    # scores[h, s, q]: TQ (>=128) sits on lanes so the softmax is lane-dense;
    # the small text length S sits on sublanes and needs no 128 alignment.
    # TODO(synk): for very large S on v7x (64 MiB VMEM), block the softmax
    # over S (online softmax) instead of materializing the full (H, S, TQ).
    scores = jax.lax.dot_general(
        k3, q3, dimension_numbers=(((1,), (1,)), ((0,), (0,))),
        preferred_element_type=jnp.float32)                            # (H, S, TQ) f32

    # Softmax over keys (axis=1); all VPU/EUP work is lane-dense on TQ.
    scores = scores - jnp.max(scores, axis=1, keepdims=True)
    p = jnp.exp(scores)
    denom = jnp.sum(p, axis=1, keepdims=True)
    p = p * pl.reciprocal(denom, approx=True)                          # EUP, not VPU divide

    # att[h, d, q] = sum_s v3[h, d, s] * p[h, s, q]
    att = jax.lax.dot_general(
        v3, p.astype(v3.dtype),
        dimension_numbers=(((2,), (1,)), ((0,), (0,))),
        preferred_element_type=jnp.float32)                            # (H, D, TQ) f32
    att = att.reshape(num_heads * head_dim, tq).astype(x.dtype)        # (C, TQ)

    out = jnp.dot(wo_ref[...], att, preferred_element_type=jnp.float32) + bo_ref[...]
    out_ref[0] = out.astype(out_ref.dtype)                             # lane-dense store


# ----------------------------------------------------------------------------
# VMEM budgeting / tiling helpers
# ----------------------------------------------------------------------------

def _round_up(x, m):
    return ((x + m - 1) // m) * m


def _vmem_budget_bytes():
    """~75% of this chip's VMEM (v5e/v6e: 128 MiB -> 96 MiB, v7x: 64 -> 48 MiB)."""
    try:
        cap = int(pltpu.get_tpu_info().vmem_capacity_bytes)
    except Exception:
        cap = 64 * 1024 * 1024      # conservative fallback (v7x-sized)
    return (cap * 3) // 4


def _choose_q_tile(hw, target, C, E, S, nh, elt, budget):
    """Largest 128-aligned query tile whose working set fits the VMEM budget."""
    hw128 = _round_up(hw, 128)
    # Constant terms: weights (single-buffered), biases, text block (x2), K/V scratch.
    const = (2 * C * C + 2 * C * E) * elt + 4 * C * 4 + 2 * E * S * elt + 2 * C * S * elt
    # Per-query-column bytes: in/out blocks (double-buffered) + f32 intermediates
    # (qt, scores, p, att, out) + activation-dtype copies (q3, att cast).
    per_q = 4 * C * elt + 3 * C * 4 + 2 * C * elt + 2 * nh * S * 4
    avail = max(budget - const, 128 * per_q)
    max_tq = max(128, ((avail // per_q) // 128) * 128)
    tq = min(_round_up(max(1, min(target, hw128)), 128), max_tq, hw128)
    hw_pad = _round_up(hw, tq)
    return tq, hw_pad


# ----------------------------------------------------------------------------
# Wrapper
# ----------------------------------------------------------------------------

def cross_attention_block(img, text_emb, params, num_heads, tile_q=1024):
    """img: (B, C, H, W), text_emb: (B, S, E) -> (B, C, H, W).

    Weights in torch nn.Linear layout: W (out_features, in_features), b (out,).
    For best performance C // num_heads (head_dim) should be a multiple of 8.
    """
    B, C, H, W = img.shape
    S, E = text_emb.shape[1], text_emb.shape[2]
    HW = H * W
    head_dim = C // num_heads
    assert num_heads * head_dim == C, "input_channels must be divisible by heads"
    wq, bq, wk, bk, wv, bv, wo, bo = params

    cdt = img.dtype                              # compute/operand dtype
    elt = jnp.dtype(cdt).itemsize

    # Fold the 1/sqrt(head_dim) softmax scale into the Q projection (once,
    # outside the hot loop); feed weights in the activation dtype so the MXU
    # sees bf16 operands when the activations are bf16.  Biases stay f32 and
    # are added to the f32 accumulator.
    scale = 1.0 / math.sqrt(head_dim)
    wq_s = (wq.astype(jnp.float32) * scale).astype(cdt)
    wk_c = wk.astype(cdt)
    wv_c = wv.astype(cdt)
    wo_c = wo.astype(cdt)
    bq_s = (bq.astype(jnp.float32) * scale).reshape(C, 1)
    bk2 = bk.astype(jnp.float32).reshape(C, 1)
    bv2 = bv.astype(jnp.float32).reshape(C, 1)
    bo2 = bo.astype(jnp.float32).reshape(C, 1)

    budget = _vmem_budget_bytes()
    tq, hw_pad = _choose_q_tile(HW, tile_q, C, E, S, num_heads, elt, budget)
    n_q = hw_pad // tq

    # Layout plumbing only: channels-first image is a free reshape; pad the
    # (independent) query axis up to a multiple of the 128-aligned tile.
    x = img.reshape(B, C, HW)
    if hw_pad != HW:
        x = jnp.pad(x, ((0, 0), (0, 0), (0, hw_pad - HW)))
    t_t = text_emb.transpose(0, 2, 1)            # (B, E, S), tiny

    kernel = functools.partial(cross_attn_kernel,
                               num_heads=num_heads, head_dim=head_dim)

    def run(single_buffer_consts):
        if single_buffer_consts:
            def const_spec(shape):
                # Constant-index blocks: one VMEM buffer is enough (v7x VMEM).
                return pl.BlockSpec(shape, lambda b, q: (0, 0),
                                    pipeline_mode=pl.Buffered(1))
        else:
            def const_spec(shape):
                return pl.BlockSpec(shape, lambda b, q: (0, 0))

        return pl.pallas_call(
            kernel,
            out_shape=jax.ShapeDtypeStruct((B, C, hw_pad), img.dtype),
            grid=(B, n_q),
            in_specs=[
                pl.BlockSpec((1, C, tq), lambda b, q: (b, 0, q)),   # image tile
                pl.BlockSpec((1, E, S), lambda b, q: (b, 0, 0)),    # text (per batch)
                const_spec((C, C)),                                  # Wq (pre-scaled)
                const_spec((C, 1)),                                  # bq (pre-scaled)
                const_spec((C, E)),                                  # Wk
                const_spec((C, 1)),                                  # bk
                const_spec((C, E)),                                  # Wv
                const_spec((C, 1)),                                  # bv
                const_spec((C, C)),                                  # Wo
                const_spec((C, 1)),                                  # bo
            ],
            out_specs=pl.BlockSpec((1, C, tq), lambda b, q: (b, 0, q)),
            scratch_shapes=[pltpu.VMEM((C, S), cdt),                 # K (per batch)
                            pltpu.VMEM((C, S), cdt)],                # V (per batch)
            compiler_params=pltpu.CompilerParams(
                # q carries the K/V scratch -> "arbitrary"; b stays "parallel"
                # (megacore shards whole batches across TensorCores on v7x).
                dimension_semantics=("parallel", "arbitrary"),
                vmem_limit_bytes=int(budget)),
        )(x, t_t, wq_s, bq_s, wk_c, bk2, wv_c, bv2, wo_c, bo2)

    try:
        out_cf = run(True)
    except Exception:
        # Installed Pallas lacks/rejects per-BlockSpec pipeline_mode=Buffered(1):
        # fall back to default double buffering (correctness unchanged).
        out_cf = run(False)

    if hw_pad != HW:
        out_cf = out_cf[:, :, :HW]
    return out_cf.reshape(B, C, H, W)


# ----------------------------------------------------------------------------
# Init + pure-JAX reference (matches the PyTorch forward)
# ----------------------------------------------------------------------------

def init_params(key, input_channels, text_emb_dim):
    """nn.Linear-style init, torch layout: W (out, in), b (out,)."""
    C, E = input_channels, text_emb_dim
    keys = jax.random.split(key, 8)

    def lin(kw, kb, fan_in, fan_out):
        bound = 1.0 / math.sqrt(fan_in)
        w = jax.random.uniform(kw, (fan_out, fan_in), jnp.float32, -bound, bound)
        b = jax.random.uniform(kb, (fan_out,), jnp.float32, -bound, bound)
        return w, b

    wq, bq = lin(keys[0], keys[1], C, C)
    wk, bk = lin(keys[2], keys[3], E, C)
    wv, bv = lin(keys[4], keys[5], E, C)
    wo, bo = lin(keys[6], keys[7], C, C)
    return (wq, bq, wk, bk, wv, bv, wo, bo)


def reference_forward(img, text_emb, params, num_heads):
    B, C, H, W = img.shape
    HW = H * W
    head_dim = C // num_heads
    wq, bq, wk, bk, wv, bv, wo, bo = params

    x = img.reshape(B, C, HW).transpose(0, 2, 1)                 # (B, HW, C)
    Q = x @ wq.T + bq
    K = text_emb @ wk.T + bk
    V = text_emb @ wv.T + bv

    def split(a):
        return a.reshape(B, a.shape[1], num_heads, head_dim).transpose(0, 2, 1, 3)

    Qh, Kh, Vh = split(Q), split(K), split(V)
    scores = jnp.einsum('bhqd,bhkd->bhqk', Qh, Kh) / jnp.sqrt(jnp.float32(head_dim))
    weights = jax.nn.softmax(scores, axis=-1)
    att = jnp.einsum('bhqk,bhkd->bhqd', weights, Vh)
    att = att.transpose(0, 2, 1, 3).reshape(B, HW, C)
    out = att @ wo.T + bo
    return out.transpose(0, 2, 1).reshape(B, C, H, W)


if __name__ == "__main__":
    # Small deterministic example consistent with the module:
    # heads=2, input_channels=4, height=width=16, text_emb_dim=32, seq=8.
    B, C, H, W = 2, 4, 16, 16
    heads = 2
    seq, text_emb_dim = 8, 32

    key = jax.random.PRNGKey(0)
    k_img, k_txt, k_par = jax.random.split(key, 3)
    img = jax.random.normal(k_img, (B, C, H, W), jnp.float32)
    text_emb = jax.random.normal(k_txt, (B, seq, text_emb_dim), jnp.float32)
    params = init_params(k_par, C, text_emb_dim)

    # tile_q=128 -> two query tiles per batch (exercises the pipelined q axis
    # and the per-batch K/V recompute under pl.when).
    out = cross_attention_block(img, text_emb, params, heads, tile_q=128)
    out = jax.block_until_ready(out)

    ref = reference_forward(img, text_emb, params, heads)
    assert out.shape == (B, C, H, W)
    max_err = jnp.max(jnp.abs(out - ref))
    # tolerance allows the approximate (EUP) reciprocal in the softmax denominator
    assert jnp.allclose(out, ref, atol=2e-3, rtol=2e-3), \
        f"mismatch vs reference (max |err|={max_err})"

    print("KERNEL_OK")
</pallas_src>

<mosaic_0001>
module attributes {stable_mosaic.version = 11 : i64} {
  func.func @cross_attn_kernel(%arg0: i32, %arg1: i32, %arg2: memref<1x4x128xf32, #tpu.memory_space<vmem>>, %arg3: memref<1x32x8xf32, #tpu.memory_space<vmem>>, %arg4: memref<4x4xf32, #tpu.memory_space<vmem>>, %arg5: memref<4x1xf32, #tpu.memory_space<vmem>>, %arg6: memref<4x32xf32, #tpu.memory_space<vmem>>, %arg7: memref<4x1xf32, #tpu.memory_space<vmem>>, %arg8: memref<4x32xf32, #tpu.memory_space<vmem>>, %arg9: memref<4x1xf32, #tpu.memory_space<vmem>>, %arg10: memref<4x4xf32, #tpu.memory_space<vmem>>, %arg11: memref<4x1xf32, #tpu.memory_space<vmem>>, %arg12: memref<1x4x128xf32, #tpu.memory_space<vmem>>, %arg13: memref<4x8xf32, #tpu.memory_space<vmem>>, %arg14: memref<4x8xf32, #tpu.memory_space<vmem>>) attributes {dimension_semantics = [#tpu.dimension_semantics<parallel>, #tpu.dimension_semantics<arbitrary>], iteration_bounds = array<i64: 2, 2>, scalar_prefetch = 0 : i64, scratch_operands = 2 : i64, tpu.core_type = #tpu.core_type<tc>, window_params = [{transform_indices = @transform_0, window_bounds = array<i64: 1, 4, 128>}, {transform_indices = @transform_1, window_bounds = array<i64: 1, 32, 8>}, {pipeline_mode = #tpu.pipeline_mode<synchronous>, transform_indices = @transform_2, window_bounds = array<i64: 4, 4>}, {pipeline_mode = #tpu.pipeline_mode<synchronous>, transform_indices = @transform_3, window_bounds = array<i64: 4, 1>}, {pipeline_mode = #tpu.pipeline_mode<synchronous>, transform_indices = @transform_4, window_bounds = array<i64: 4, 32>}, {pipeline_mode = #tpu.pipeline_mode<synchronous>, transform_indices = @transform_5, window_bounds = array<i64: 4, 1>}, {pipeline_mode = #tpu.pipeline_mode<synchronous>, transform_indices = @transform_6, window_bounds = array<i64: 4, 32>}, {pipeline_mode = #tpu.pipeline_mode<synchronous>, transform_indices = @transform_7, window_bounds = array<i64: 4, 1>}, {pipeline_mode = #tpu.pipeline_mode<synchronous>, transform_indices = @transform_8, window_bounds = array<i64: 4, 4>}, {pipeline_mode = #tpu.pipeline_mode<synchronous>, transform_indices = @transform_9, window_bounds = array<i64: 4, 1>}, {transform_indices = @transform_10, window_bounds = array<i64: 1, 4, 128>}]} {
    %c0_i32 = arith.constant 0 : i32
    %0 = arith.cmpi eq, %arg1, %c0_i32 : i32
    %1 = arith.extui %0 : i1 to i32
    %c0_i32_0 = arith.constant 0 : i32
    %2 = arith.cmpi ne, %1, %c0_i32_0 : i32
    scf.if %2 {
      %c0_23 = arith.constant 0 : index
      %c0_24 = arith.constant 0 : index
      %c0_25 = arith.constant 0 : index
      %36 = vector.load %arg3[%c0_23, %c0_24, %c0_25] : memref<1x32x8xf32, #tpu.memory_space<vmem>>, vector<1x32x8xf32>
      %37 = vector.shape_cast %36 : vector<1x32x8xf32> to vector<32x8xf32>
      %c0_26 = arith.constant 0 : index
      %c0_27 = arith.constant 0 : index
      %38 = vector.load %arg6[%c0_26, %c0_27] : memref<4x32xf32, #tpu.memory_space<vmem>>, vector<4x32xf32>
      %cst_28 = arith.constant dense<0.000000e+00> : vector<4x8xf32>
      %39 = tpu.matmul %38, %37, %cst_28 {dimension_numbers = #tpu.dot_dimension_numbers<[1], [0], [0], [1], [0, 0, 1, 1], [], []>} : vector<4x32xf32>, vector<32x8xf32>, vector<4x8xf32> -> vector<4x8xf32>
      %c0_29 = arith.constant 0 : index
      %c0_30 = arith.constant 0 : index
      %40 = vector.load %arg7[%c0_29, %c0_30] : memref<4x1xf32, #tpu.memory_space<vmem>>, vector<4x1xf32>
      %41 = vector.broadcast %40 : vector<4x1xf32> to vector<4x8xf32>
      %42 = arith.addf %39, %41 : vector<4x8xf32>
      %c0_31 = arith.constant 0 : index
      %c0_32 = arith.constant 0 : index
      %43 = vector.load %arg8[%c0_31, %c0_32] : memref<4x32xf32, #tpu.memory_space<vmem>>, vector<4x32xf32>
      %cst_33 = arith.constant dense<0.000000e+00> : vector<4x8xf32>
      %44 = tpu.matmul %43, %37, %cst_33 {dimension_numbers = #tpu.dot_dimension_numbers<[1], [0], [0], [1], [0, 0, 1, 1], [], []>} : vector<4x32xf32>, vector<32x8xf32>, vector<4x8xf32> -> vector<4x8xf32>
      %c0_34 = arith.constant 0 : index
      %c0_35 = arith.constant 0 : index
      %45 = vector.load %arg9[%c0_34, %c0_35] : memref<4x1xf32, #tpu.memory_space<vmem>>, vector<4x1xf32>
      %46 = vector.broadcast %45 : vector<4x1xf32> to vector<4x8xf32>
      %47 = arith.addf %44, %46 : vector<4x8xf32>
      %c0_36 = arith.constant 0 : index
      %c0_37 = arith.constant 0 : index
      %48 = vector.load %arg13[%c0_36, %c0_37] : memref<4x8xf32, #tpu.memory_space<vmem>>, vector<4x8xf32>
      tpu.vector_store %arg13[%c0_36, %c0_37], %42 {strides = array<i32>} : memref<4x8xf32, #tpu.memory_space<vmem>>, vector<4x8xf32>,
      %c0_38 = arith.constant 0 : index
      %c0_39 = arith.constant 0 : index
      %49 = vector.load %arg14[%c0_38, %c0_39] : memref<4x8xf32, #tpu.memory_space<vmem>>, vector<4x8xf32>
      tpu.vector_store %arg14[%c0_38, %c0_39], %47 {strides = array<i32>} : memref<4x8xf32, #tpu.memory_space<vmem>>, vector<4x8xf32>,
    } else {
    }
    %c0 = arith.constant 0 : index
    %c0_1 = arith.constant 0 : index
    %c0_2 = arith.constant 0 : index
    %3 = vector.load %arg2[%c0, %c0_1, %c0_2] : memref<1x4x128xf32, #tpu.memory_space<vmem>>, vector<1x4x128xf32>
    %4 = vector.shape_cast %3 : vector<1x4x128xf32> to vector<4x128xf32>
    %c0_3 = arith.constant 0 : index
    %c0_4 = arith.constant 0 : index
    %5 = vector.load %arg4[%c0_3, %c0_4] : memref<4x4xf32, #tpu.memory_space<vmem>>, vector<4x4xf32>
    %cst = arith.constant dense<0.000000e+00> : vector<4x128xf32>
    %6 = tpu.matmul %5, %4, %cst {dimension_numbers = #tpu.dot_dimension_numbers<[1], [0], [0], [1], [0, 0, 1, 1], [], []>} : vector<4x4xf32>, vector<4x128xf32>, vector<4x128xf32> -> vector<4x128xf32>
    %c0_5 = arith.constant 0 : index
    %c0_6 = arith.constant 0 : index
    %7 = vector.load %arg5[%c0_5, %c0_6] : memref<4x1xf32, #tpu.memory_space<vmem>>, vector<4x1xf32>
    %8 = vector.broadcast %7 : vector<4x1xf32> to vector<4x128xf32>
    %9 = arith.addf %6, %8 : vector<4x128xf32>
    %10 = vector.shape_cast %9 : vector<4x128xf32> to vector<2x2x128xf32>
    %c0_7 = arith.constant 0 : index
    %c0_8 = arith.constant 0 : index
    %11 = vector.load %arg13[%c0_7, %c0_8] : memref<4x8xf32, #tpu.memory_space<vmem>>, vector<4x8xf32>
    %12 = vector.shape_cast %11 : vector<4x8xf32> to vector<2x2x8xf32>
    %c0_9 = arith.constant 0 : index
    %c0_10 = arith.constant 0 : index
    %13 = vector.load %arg14[%c0_9, %c0_10] : memref<4x8xf32, #tpu.memory_space<vmem>>, vector<4x8xf32>
    %14 = vector.shape_cast %13 : vector<4x8xf32> to vector<2x2x8xf32>
    %cst_11 = arith.constant dense<0.000000e+00> : vector<2x8x128xf32>
    %15 = tpu.matmul %12, %10, %cst_11 {dimension_numbers = #tpu.dot_dimension_numbers<[1], [1], [2], [2], [0, 0, 0, 2, 1, 2], [0], [0]>} : vector<2x2x8xf32>, vector<2x2x128xf32>, vector<2x8x128xf32> -> vector<2x8x128xf32>
    %cst_12 = arith.constant dense<0xFF800000> : vector<2x128xf32>
    %16 = vector.multi_reduction <maximumf>, %15, %cst_12 [1] : vector<2x8x128xf32> to vector<2x128xf32>
    %17 = vector.shape_cast %16 : vector<2x128xf32> to vector<2x1x128xf32>
    %18 = vector.broadcast %17 : vector<2x1x128xf32> to vector<2x8x128xf32>
    %19 = arith.subf %15, %18 : vector<2x8x128xf32>
    %20 = math.exp %19 : vector<2x8x128xf32>
    %cst_13 = arith.constant dense<0.000000e+00> : vector<2x128xf32>
    %21 = vector.multi_reduction <add>, %20, %cst_13 [1] : vector<2x8x128xf32> to vector<2x128xf32>
    %22 = vector.shape_cast %21 : vector<2x128xf32> to vector<2x1x128xf32>
    %23 = tpu.reciprocal %22 {approx = true} : vector<2x1x128xf32> -> vector<2x1x128xf32>
    %24 = vector.broadcast %23 : vector<2x1x128xf32> to vector<2x8x128xf32>
    %25 = arith.mulf %20, %24 : vector<2x8x128xf32>
    %cst_14 = arith.constant dense<0.000000e+00> : vector<2x2x128xf32>
    %26 = tpu.matmul %14, %25, %cst_14 {dimension_numbers = #tpu.dot_dimension_numbers<[2], [1], [1], [2], [0, 0, 0, 1, 1, 2], [0], [0]>} : vector<2x2x8xf32>, vector<2x8x128xf32>, vector<2x2x128xf32> -> vector<2x2x128xf32>
    %27 = vector.shape_cast %26 : vector<2x2x128xf32> to vector<4x128xf32>
    %c0_15 = arith.constant 0 : index
    %c0_16 = arith.constant 0 : index
    %28 = vector.load %arg10[%c0_15, %c0_16] : memref<4x4xf32, #tpu.memory_space<vmem>>, vector<4x4xf32>
    %cst_17 = arith.constant dense<0.000000e+00> : vector<4x128xf32>
    %29 = tpu.matmul %28, %27, %cst_17 {dimension_numbers = #tpu.dot_dimension_numbers<[1], [0], [0], [1], [0, 0, 1, 1], [], []>} : vector<4x4xf32>, vector<4x128xf32>, vector<4x128xf32> -> vector<4x128xf32>
    %c0_18 = arith.constant 0 : index
    %c0_19 = arith.constant 0 : index
    %30 = vector.load %arg11[%c0_18, %c0_19] : memref<4x1xf32, #tpu.memory_space<vmem>>, vector<4x1xf32>
    %31 = vector.broadcast %30 : vector<4x1xf32> to vector<4x128xf32>
    %32 = arith.addf %29, %31 : vector<4x128xf32>
    %c0_20 = arith.constant 0 : index
    %c0_21 = arith.constant 0 : index
    %c0_22 = arith.constant 0 : index
    %33 = vector.load %arg12[%c0_20, %c0_21, %c0_22] : memref<1x4x128xf32, #tpu.memory_space<vmem>>, vector<1x4x128xf32>
    %34 = vector.shape_cast %33 : vector<1x4x128xf32> to vector<4x128xf32>
    %35 = vector.shape_cast %32 : vector<4x128xf32> to vector<1x4x128xf32>
    tpu.vector_store %arg12[%c0_20, %c0_21, %c0_22], %35 {strides = array<i32>} : memref<1x4x128xf32, #tpu.memory_space<vmem>>, vector<1x4x128xf32>,
    return
  }
  func.func @transform_0(%arg0: i32, %arg1: i32) -> (i32, i32, i32) {
    %c0_i32 = arith.constant 0 : i32
    %c0_i32_0 = arith.constant 0 : i32
    return %arg0, %c0_i32, %arg1 : i32, i32, i32
  }
  func.func @transform_1(%arg0: i32, %arg1: i32) -> (i32, i32, i32) {
    %c0_i32 = arith.constant 0 : i32
    %c0_i32_0 = arith.constant 0 : i32
    %c0_i32_1 = arith.constant 0 : i32
    return %arg0, %c0_i32, %c0_i32_0 : i32, i32, i32
  }
  func.func @transform_2(%arg0: i32, %arg1: i32) -> (i32, i32) {
    %c0_i32 = arith.constant 0 : i32
    %c0_i32_0 = arith.constant 0 : i32
    %c0_i32_1 = arith.constant 0 : i32
    return %c0_i32, %c0_i32_0 : i32, i32
  }
  func.func @transform_3(%arg0: i32, %arg1: i32) -> (i32, i32) {
    %c0_i32 = arith.constant 0 : i32
    %c0_i32_0 = arith.constant 0 : i32
    %c0_i32_1 = arith.constant 0 : i32
    return %c0_i32, %c0_i32_0 : i32, i32
  }
  func.func @transform_4(%arg0: i32, %arg1: i32) -> (i32, i32) {
    %c0_i32 = arith.constant 0 : i32
    %c0_i32_0 = arith.constant 0 : i32
    %c0_i32_1 = arith.constant 0 : i32
    return %c0_i32, %c0_i32_0 : i32, i32
  }
  func.func @transform_5(%arg0: i32, %arg1: i32) -> (i32, i32) {
    %c0_i32 = arith.constant 0 : i32
    %c0_i32_0 = arith.constant 0 : i32
    %c0_i32_1 = arith.constant 0 : i32
    return %c0_i32, %c0_i32_0 : i32, i32
  }
  func.func @transform_6(%arg0: i32, %arg1: i32) -> (i32, i32) {
    %c0_i32 = arith.constant 0 : i32
    %c0_i32_0 = arith.constant 0 : i32
    %c0_i32_1 = arith.constant 0 : i32
    return %c0_i32, %c0_i32_0 : i32, i32
  }
  func.func @transform_7(%arg0: i32, %arg1: i32) -> (i32, i32) {
    %c0_i32 = arith.constant 0 : i32
    %c0_i32_0 = arith.constant 0 : i32
    %c0_i32_1 = arith.constant 0 : i32
    return %c0_i32, %c0_i32_0 : i32, i32
  }
  func.func @transform_8(%arg0: i32, %arg1: i32) -> (i32, i32) {
    %c0_i32 = arith.constant 0 : i32
    %c0_i32_0 = arith.constant 0 : i32
    %c0_i32_1 = arith.constant 0 : i32
    return %c0_i32, %c0_i32_0 : i32, i32
  }
  func.func @transform_9(%arg0: i32, %arg1: i32) -> (i32, i32) {
    %c0_i32 = arith.constant 0 : i32
    %c0_i32_0 = arith.constant 0 : i32
    %c0_i32_1 = arith.constant 0 : i32
    return %c0_i32, %c0_i32_0 : i32, i32
  }
  func.func @transform_10(%arg0: i32, %arg1: i32) -> (i32, i32, i32) {
    %c0_i32 = arith.constant 0 : i32
    %c0_i32_0 = arith.constant 0 : i32
    return %arg0, %c0_i32, %arg1 : i32, i32, i32
  }
}

module attributes {stable_mosaic.version = 11 : i64} {
  func.func @cross_attn_kernel(%arg0: i32, %arg1: i32, %arg2: memref<1x4x128xf32, #tpu.memory_space<vmem>>, %arg3: memref<1x32x8xf32, #tpu.memory_space<vmem>>, %arg4: memref<4x4xf32, #tpu.memory_space<vmem>>, %arg5: memref<4x1xf32, #tpu.memory_space<vmem>>, %arg6: memref<4x32xf32, #tpu.memory_space<vmem>>, %arg7: memref<4x1xf32, #tpu.memory_space<vmem>>, %arg8: memref<4x32xf32, #tpu.memory_space<vmem>>, %arg9: memref<4x1xf32, #tpu.memory_space<vmem>>, %arg10: memref<4x4xf32, #tpu.memory_space<vmem>>, %arg11: memref<4x1xf32, #tpu.memory_space<vmem>>, %arg12: memref<1x4x128xf32, #tpu.memory_space<vmem>>, %arg13: memref<4x8xf32, #tpu.memory_space<vmem>>, %arg14: memref<4x8xf32, #tpu.memory_space<vmem>>) attributes {dimension_semantics = [#tpu.dimension_semantics<parallel>, #tpu.dimension_semantics<arbitrary>], iteration_bounds = array<i64: 2, 2>, scalar_prefetch = 0 : i64, scratch_operands = 2 : i64, tpu.core_type = #tpu.core_type<tc>, window_params = [{transform_indices = @transform_0, window_bounds = array<i64: 1, 4, 128>}, {transform_indices = @transform_1, window_bounds = array<i64: 1, 32, 8>}, {pipeline_mode = #tpu.pipeline_mode<synchronous>, transform_indices = @transform_2, window_bounds = array<i64: 4, 4>}, {pipeline_mode = #tpu.pipeline_mode<synchronous>, transform_indices = @transform_3, window_bounds = array<i64: 4, 1>}, {pipeline_mode = #tpu.pipeline_mode<synchronous>, transform_indices = @transform_4, window_bounds = array<i64: 4, 32>}, {pipeline_mode = #tpu.pipeline_mode<synchronous>, transform_indices = @transform_5, window_bounds = array<i64: 4, 1>}, {pipeline_mode = #tpu.pipeline_mode<synchronous>, transform_indices = @transform_6, window_bounds = array<i64: 4, 32>}, {pipeline_mode = #tpu.pipeline_mode<synchronous>, transform_indices = @transform_7, window_bounds = array<i64: 4, 1>}, {pipeline_mode = #tpu.pipeline_mode<synchronous>, transform_indices = @transform_8, window_bounds = array<i64: 4, 4>}, {pipeline_mode = #tpu.pipeline_mode<synchronous>, transform_indices = @transform_9, window_bounds = array<i64: 4, 1>}, {transform_indices = @transform_10, window_bounds = array<i64: 1, 4, 128>}]} {
    %c0_i32 = arith.constant 0 : i32
    %0 = arith.cmpi eq, %arg1, %c0_i32 : i32
    %1 = arith.extui %0 : i1 to i32
    %c0_i32_0 = arith.constant 0 : i32
    %2 = arith.cmpi ne, %1, %c0_i32_0 : i32
    scf.if %2 {
      %c0_23 = arith.constant 0 : index
      %c0_24 = arith.constant 0 : index
      %c0_25 = arith.constant 0 : index
      %36 = vector.load %arg3[%c0_23, %c0_24, %c0_25] : memref<1x32x8xf32, #tpu.memory_space<vmem>>, vector<1x32x8xf32>
      %37 = vector.shape_cast %36 : vector<1x32x8xf32> to vector<32x8xf32>
      %c0_26 = arith.constant 0 : index
      %c0_27 = arith.constant 0 : index
      %38 = vector.load %arg6[%c0_26, %c0_27] : memref<4x32xf32, #tpu.memory_space<vmem>>, vector<4x32xf32>
      %cst_28 = arith.constant dense<0.000000e+00> : vector<4x8xf32>
      %39 = tpu.matmul %38, %37, %cst_28 {dimension_numbers = #tpu.dot_dimension_numbers<[1], [0], [0], [1], [0, 0, 1, 1], [], []>} : vector<4x32xf32>, vector<32x8xf32>, vector<4x8xf32> -> vector<4x8xf32>
      %c0_29 = arith.constant 0 : index
      %c0_30 = arith.constant 0 : index
      %40 = vector.load %arg7[%c0_29, %c0_30] : memref<4x1xf32, #tpu.memory_space<vmem>>, vector<4x1xf32>
      %41 = vector.broadcast %40 : vector<4x1xf32> to vector<4x8xf32>
      %42 = arith.addf %39, %41 : vector<4x8xf32>
      %c0_31 = arith.constant 0 : index
      %c0_32 = arith.constant 0 : index
      %43 = vector.load %arg8[%c0_31, %c0_32] : memref<4x32xf32, #tpu.memory_space<vmem>>, vector<4x32xf32>
      %cst_33 = arith.constant dense<0.000000e+00> : vector<4x8xf32>
      %44 = tpu.matmul %43, %37, %cst_33 {dimension_numbers = #tpu.dot_dimension_numbers<[1], [0], [0], [1], [0, 0, 1, 1], [], []>} : vector<4x32xf32>, vector<32x8xf32>, vector<4x8xf32> -> vector<4x8xf32>
      %c0_34 = arith.constant 0 : index
      %c0_35 = arith.constant 0 : index
      %45 = vector.load %arg9[%c0_34, %c0_35] : memref<4x1xf32, #tpu.memory_space<vmem>>, vector<4x1xf32>
      %46 = vector.broadcast %45 : vector<4x1xf32> to vector<4x8xf32>
      %47 = arith.addf %44, %46 : vector<4x8xf32>
      %c0_36 = arith.constant 0 : index
      %c0_37 = arith.constant 0 : index
      %48 = vector.load %arg13[%c0_36, %c0_37] : memref<4x8xf32, #tpu.memory_space<vmem>>, vector<4x8xf32>
      tpu.vector_store %arg13[%c0_36, %c0_37], %42 {strides = array<i32>} : memref<4x8xf32, #tpu.memory_space<vmem>>, vector<4x8xf32>,
      %c0_38 = arith.constant 0 : index
      %c0_39 = arith.constant 0 : index
      %49 = vector.load %arg14[%c0_38, %c0_39] : memref<4x8xf32, #tpu.memory_space<vmem>>, vector<4x8xf32>
      tpu.vector_store %arg14[%c0_38, %c0_39], %47 {strides = array<i32>} : memref<4x8xf32, #tpu.memory_space<vmem>>, vector<4x8xf32>,
    } else {
    }
    %c0 = arith.constant 0 : index
    %c0_1 = arith.constant 0 : index
    %c0_2 = arith.constant 0 : index
    %3 = vector.load %arg2[%c0, %c0_1, %c0_2] : memref<1x4x128xf32, #tpu.memory_space<vmem>>, vector<1x4x128xf32>
    %4 = vector.shape_cast %3 : vector<1x4x128xf32> to vector<4x128xf32>
    %c0_3 = arith.constant 0 : index
    %c0_4 = arith.constant 0 : index
    %5 = vector.load %arg4[%c0_3, %c0_4] : memref<4x4xf32, #tpu.memory_space<vmem>>, vector<4x4xf32>
    %cst = arith.constant dense<0.000000e+00> : vector<4x128xf32>
    %6 = tpu.matmul %5, %4, %cst {dimension_numbers = #tpu.dot_dimension_numbers<[1], [0], [0], [1], [0, 0, 1, 1], [], []>} : vector<4x4xf32>, vector<4x128xf32>, vector<4x128xf32> -> vector<4x128xf32>
    %c0_5 = arith.constant 0 : index
    %c0_6 = arith.constant 0 : index
    %7 = vector.load %arg5[%c0_5, %c0_6] : memref<4x1xf32, #tpu.memory_space<vmem>>, vector<4x1xf32>
    %8 = vector.broadcast %7 : vector<4x1xf32> to vector<4x128xf32>
    %9 = arith.addf %6, %8 : vector<4x128xf32>
    %10 = vector.shape_cast %9 : vector<4x128xf32> to vector<2x2x128xf32>
    %c0_7 = arith.constant 0 : index
    %c0_8 = arith.constant 0 : index
    %11 = vector.load %arg13[%c0_7, %c0_8] : memref<4x8xf32, #tpu.memory_space<vmem>>, vector<4x8xf32>
    %12 = vector.shape_cast %11 : vector<4x8xf32> to vector<2x2x8xf32>
    %c0_9 = arith.constant 0 : index
    %c0_10 = arith.constant 0 : index
    %13 = vector.load %arg14[%c0_9, %c0_10] : memref<4x8xf32, #tpu.memory_space<vmem>>, vector<4x8xf32>
    %14 = vector.shape_cast %13 : vector<4x8xf32> to vector<2x2x8xf32>
    %cst_11 = arith.constant dense<0.000000e+00> : vector<2x8x128xf32>
    %15 = tpu.matmul %12, %10, %cst_11 {dimension_numbers = #tpu.dot_dimension_numbers<[1], [1], [2], [2], [0, 0, 0, 2, 1, 2], [0], [0]>} : vector<2x2x8xf32>, vector<2x2x128xf32>, vector<2x8x128xf32> -> vector<2x8x128xf32>
    %cst_12 = arith.constant dense<0xFF800000> : vector<2x128xf32>
    %16 = vector.multi_reduction <maximumf>, %15, %cst_12 [1] : vector<2x8x128xf32> to vector<2x128xf32>
    %17 = vector.shape_cast %16 : vector<2x128xf32> to vector<2x1x128xf32>
    %18 = vector.broadcast %17 : vector<2x1x128xf32> to vector<2x8x128xf32>
    %19 = arith.subf %15, %18 : vector<2x8x128xf32>
    %20 = math.exp %19 : vector<2x8x128xf32>
    %cst_13 = arith.constant dense<0.000000e+00> : vector<2x128xf32>
    %21 = vector.multi_reduction <add>, %20, %cst_13 [1] : vector<2x8x128xf32> to vector<2x128xf32>
    %22 = vector.shape_cast %21 : vector<2x128xf32> to vector<2x1x128xf32>
    %23 = tpu.reciprocal %22 {approx = true} : vector<2x1x128xf32> -> vector<2x1x128xf32>
    %24 = vector.broadcast %23 : vector<2x1x128xf32> to vector<2x8x128xf32>
    %25 = arith.mulf %20, %24 : vector<2x8x128xf32>
    %cst_14 = arith.constant dense<0.000000e+00> : vector<2x2x128xf32>
    %26 = tpu.matmul %14, %25, %cst_14 {dimension_numbers = #tpu.dot_dimension_numbers<[2], [1], [1], [2], [0, 0, 0, 1, 1, 2], [0], [0]>} : vector<2x2x8xf32>, vector<2x8x128xf32>, vector<2x2x128xf32> -> vector<2x2x128xf32>
    %27 = vector.shape_cast %26 : vector<2x2x128xf32> to vector<4x128xf32>
    %c0_15 = arith.constant 0 : index
    %c0_16 = arith.constant 0 : index
    %28 = vector.load %arg10[%c0_15, %c0_16] : memref<4x4xf32, #tpu.memory_space<vmem>>, vector<4x4xf32>
    %cst_17 = arith.constant dense<0.000000e+00> : vector<4x128xf32>
    %29 = tpu.matmul %28, %27, %cst_17 {dimension_numbers = #tpu.dot_dimension_numbers<[1], [0], [0], [1], [0, 0, 1, 1], [], []>} : vector<4x4xf32>, vector<4x128xf32>, vector<4x128xf32> -> vector<4x128xf32>
    %c0_18 = arith.constant 0 : index
    %c0_19 = arith.constant 0 : index
    %30 = vector.load %arg11[%c0_18, %c0_19] : memref<4x1xf32, #tpu.memory_space<vmem>>, vector<4x1xf32>
    %31 = vector.broadcast %30 : vector<4x1xf32> to vector<4x128xf32>
    %32 = arith.addf %29, %31 : vector<4x128xf32>
    %c0_20 = arith.constant 0 : index
    %c0_21 = arith.constant 0 : index
    %c0_22 = arith.constant 0 : index
    %33 = vector.load %arg12[%c0_20, %c0_21, %c0_22] : memref<1x4x128xf32, #tpu.memory_space<vmem>>, vector<1x4x128xf32>
    %34 = vector.shape_cast %33 : vector<1x4x128xf32> to vector<4x128xf32>
    %35 = vector.shape_cast %32 : vector<4x128xf32> to vector<1x4x128xf32>
    tpu.vector_store %arg12[%c0_20, %c0_21, %c0_22], %35 {strides = array<i32>} : memref<1x4x128xf32, #tpu.memory_space<vmem>>, vector<1x4x128xf32>,
    return
  }
  func.func @transform_0(%arg0: i32, %arg1: i32) -> (i32, i32, i32) {
    %c0_i32 = arith.constant 0 : i32
    %c0_i32_0 = arith.constant 0 : i32
    return %arg0, %c0_i32, %arg1 : i32, i32, i32
  }
  func.func @transform_1(%arg0: i32, %arg1: i32) -> (i32, i32, i32) {
    %c0_i32 = arith.constant 0 : i32
    %c0_i32_0 = arith.constant 0 : i32
    %c0_i32_1 = arith.constant 0 : i32
    return %arg0, %c0_i32, %c0_i32_0 : i32, i32, i32
  }
  func.func @transform_2(%arg0: i32, %arg1: i32) -> (i32, i32) {
    %c0_i32 = arith.constant 0 : i32
    %c0_i32_0 = arith.constant 0 : i32
    %c0_i32_1 = arith.constant 0 : i32
    return %c0_i32, %c0_i32_0 : i32, i32
  }
  func.func @transform_3(%arg0: i32, %arg1: i32) -> (i32, i32) {
    %c0_i32 = arith.constant 0 : i32
    %c0_i32_0 = arith.constant 0 : i32
    %c0_i32_1 = arith.constant 0 : i32
    return %c0_i32, %c0_i32_0 : i32, i32
  }
  func.func @transform_4(%arg0: i32, %arg1: i32) -> (i32, i32) {
    %c0_i32 = arith.constant 0 : i32
    %c0_i32_0 = arith.constant 0 : i32
    %c0_i32_1 = arith.constant 0 : i32
    return %c0_i32, %c0_i32_0 : i32, i32
  }
  func.func @transform_5(%arg0: i32, %arg1: i32) -> (i32, i32) {
    %c0_i32 = arith.constant 0 : i32
    %c0_i32_0 = arith.constant 0 : i32
    %c0_i32_1 = arith.constant 0 : i32
    return %c0_i32, %c0_i32_0 : i32, i32
  }
  func.func @transform_6(%arg0: i32, %arg1: i32) -> (i32, i32) {
    %c0_i32 = arith.constant 0 : i32
    %c0_i32_0 = arith.constant 0 : i32
    %c0_i32_1 = arith.constant 0 : i32
    return %c0_i32, %c0_i32_0 : i32, i32
  }
  func.func @transform_7(%arg0: i32, %arg1: i32) -> (i32, i32) {
    %c0_i32 = arith.constant 0 : i32
    %c0_i32_0 = arith.constant 0 : i32
    %c0_i32_1 = arith.constant 0 : i32
    return %c0_i32, %c0_i32_0 : i32, i32
  }
  func.func @transform_8(%arg0: i32, %arg1: i32) -> (i32, i32) {
    %c0_i32 = arith.constant 0 : i32
    %c0_i32_0 = arith.constant 0 : i32
    %c0_i32_1 = arith.constant 0 : i32
    return %c0_i32, %c0_i32_0 : i32, i32
  }
  func.func @transform_9(%arg0: i32, %arg1: i32) -> (i32, i32) {
    %c0_i32 = arith.constant 0 : i32
    %c0_i32_0 = arith.constant 0 : i32
    %c0_i32_1 = arith.constant 0 : i32
    return %c0_i32, %c0_i32_0 : i32, i32
  }
  func.func @transform_10(%arg0: i32, %arg1: i32) -> (i32, i32, i32) {
    %c0_i32 = arith.constant 0 : i32
    %c0_i32_0 = arith.constant 0 : i32
    return %arg0, %c0_i32, %arg1 : i32, i32, i32
  }
}

</mosaic_0001>

<llo_original>
// kernel: tpu_custom_call.1
$region0: #{tpu_custom_call.1}
  #allocation0 [shape = 'u32[]', space=smem, size = 0x4, offset = 0x4, fixed_abs, tag = 'smem constant byte address 0x4 - core index']
  #allocation1 [shape = 'u32[144,128]{1,0:T(1,128)}', space=vmem, size = 0x12000, scoped, tag = 'internal scratch']
  #allocation2 [shape = 'f32[4,8]{1,0:T(4,128)}', space=vmem, size = 0x800, scoped, tag = 'scratch operand']
  #allocation3 [shape = 'f32[4,8]{1,0:T(4,128)}', space=vmem, size = 0x800, scoped, tag = 'scratch operand']
  %s0 = inlined_call_operand.vmem [shape: f32[2,4,256], index: 0, kind: input, shape index: {}]
  %s1 = inlined_call_operand.vmem [shape: f32[2,32,8], index: 1, kind: input, shape index: {}]
  %s2 = inlined_call_operand.vmem [shape: f32[4,4], index: 2, kind: input, shape index: {}]
  %s3 = inlined_call_operand.vmem [shape: f32[4,1], index: 3, kind: input, shape index: {}]
  %s4 = inlined_call_operand.vmem [shape: f32[4,32], index: 4, kind: input, shape index: {}]
  %s5 = inlined_call_operand.vmem [shape: f32[4,1], index: 5, kind: input, shape index: {}]
  %s6 = inlined_call_operand.vmem [shape: f32[4,32], index: 6, kind: input, shape index: {}]
  %s7 = inlined_call_operand.vmem [shape: f32[4,1], index: 7, kind: input, shape index: {}]
  %s8 = inlined_call_operand.vmem [shape: f32[4,4], index: 8, kind: input, shape index: {}]
  %s9 = inlined_call_operand.vmem [shape: f32[4,1], index: 9, kind: input, shape index: {}]
  %s10 = inlined_call_operand.hbm [shape: f32[2,4,256], index: 10, kind: output, shape index: {}]
  %s11 = sld [smem:[#allocation0]]
  $region77: #{tpu_custom_call.1} parent=0
    _
  %s13 = ssub.s32 1, %s11
  %s14 = scalar_select 0, %s13, %s11
  $region1: #{tpu_custom_call.1} parent=0
    #allocation4 [shape = 'u8[4096]{0}', space=vmem, size = 0x1000, scoped, tag = 'output window, operand 0']
    #allocation5 [shape = 's32[2]{0}', space=sflag, size = 0x8, scoped, tag = 'scoped memory for tpu_custom_call.1']
    %15 = vsyncpa [#allocation5], 0
    %s16 = scalar_lea.sflag [#allocation5], 1
    %17 = vsyncpa %s16, 0
    loop: start=0, step=1, limit=6
    $region2: #{tpu_custom_call.1} parent=1 // loop_pre_header
      _
    $region3: #{tpu_custom_call.1} parent=1 // loop_header
      %s19 = sphi 0, %s23
      %p20 = scmp.ge.s32.totalorder %s19, 6
      %s26 = sphi 0, %s38
      %s27 = sphi 0, %s34
      %s28 = sphi 0, %s26
      %s29 = sphi 0, %s27
      %s30 = sphi 0, %s28
      %s31 = sphi 0, %s29
      %s43 = sphi 0, %s45
      %s46 = sphi 0, %s43
      %s47 = sphi 0, %s46
      %s63 = sphi 0, %s47
      %s69 = sphi 0, %s71
      %s72 = sphi 0, %s69
      %s73 = sphi 0, %s72
      %s89 = sphi 0, %s73
      %s93 = sphi 0, %s93
      %s95 = sphi 0, %s93
      %s96 = sphi 0, %s95
      %s110 = sphi 0, %s96
      %s114 = sphi 0, %s114
      %s116 = sphi 0, %s114
      %s117 = sphi 0, %s116
      %s131 = sphi 0, %s117
      %s135 = sphi 0, %s135
      %s137 = sphi 0, %s135
      %s138 = sphi 0, %s137
      %s152 = sphi 0, %s138
      %s156 = sphi 0, %s156
      %s158 = sphi 0, %s156
      %s159 = sphi 0, %s158
      %s173 = sphi 0, %s159
      %s177 = sphi 0, %s177
      %s179 = sphi 0, %s177
      %s180 = sphi 0, %s179
      %s194 = sphi 0, %s180
      %s198 = sphi 0, %s198
      %s200 = sphi 0, %s198
      %s201 = sphi 0, %s200
      %s215 = sphi 0, %s201
      %s219 = sphi 0, %s219
      %s221 = sphi 0, %s219
      %s222 = sphi 0, %s221
      %s236 = sphi 0, %s222
      %s240 = sphi 0, %s240
      %s242 = sphi 0, %s240
      %s243 = sphi 0, %s242
      %s257 = sphi 0, %s243
      %s265 = sphi 0, %s267
      %s268 = sphi 0, %s265
      %s269 = sphi 0, %s268
      %s285 = sphi 0, %s269
    $region4: #{tpu_custom_call.1} parent=1 // loop_header_branch
      %22 = sbr.rel (%p20) target = $region8
    $region5: #{tpu_custom_call.1} parent=1 // loop_body
      %s24 = ssub.s32 %s19, 1
      %s25 = ssub.s32 %s19, 2
      %s32 = sadd.s32 1, %s27
      %p33 = scmp.ge.s32.totalorder %s32, 2
      %s34 = scalar_select %p33, 0, %s32
      %s35 = sadd.s32 1, %s26
      %s36 = scalar_select %p33, %s35, %s26
      %p37 = scmp.ge.s32.totalorder %s36, 2
      %s38 = scalar_select %p37, 0, %s36
      %s39 = ssub.s32 %s26, %s38
      %s40 = ssub.s32 %s27, %s34
      %s41 = sor.u32 %s39, %s40
      %p42 = scmp.eq.s32.totalorder %s41, 0
      %s44 = sadd.s32 %s43, 1
      %s45 = scalar_select %p42, %s43, %s44
      %p48 = pneg %p42
      %p49 = scmp.eq.s32.totalorder %s19, 3
      %p50 = por %p48, %p49
      %p51 = scmp.ne.s32.totalorder %s43, %s46
      %p52 = scmp.eq.s32.totalorder %s19, 0
      %p53 = por %p51, %p52
      %p54 = scmp.ne.s32.totalorder %s43, %s46
      %p55 = scmp.eq.s32.totalorder %s24, 3
      %p56 = por %p54, %p55
      %p57 = scmp.ne.s32.totalorder %s46, %s47
      %p58 = scmp.eq.s32.totalorder %s24, 0
      %p59 = por %p57, %p58
      %p60 = scmp.ne.s32.totalorder %s46, %s47
      %p61 = scmp.eq.s32.totalorder %s25, 3
      %p62 = por %p60, %p61
      %p64 = scmp.ne.s32.totalorder %s47, %s63
      %p65 = scmp.eq.s32.totalorder %s25, 0
      %p66 = por %p64, %p65
      %s67 = ssub.s32 %s26, %s38
      %p68 = scmp.eq.s32.totalorder %s67, 0
      %s70 = sadd.s32 %s69, 1
      %s71 = scalar_select %p68, %s69, %s70
      %p74 = pneg %p68
      %p75 = scmp.eq.s32.totalorder %s19, 3
      %p76 = por %p74, %p75
      %p77 = scmp.ne.s32.totalorder %s69, %s72
      %p78 = scmp.eq.s32.totalorder %s19, 0
      %p79 = por %p77, %p78
      %p80 = scmp.ne.s32.totalorder %s69, %s72
      %p81 = scmp.eq.s32.totalorder %s24, 3
      %p82 = por %p80, %p81
      %p83 = scmp.ne.s32.totalorder %s72, %s73
      %p84 = scmp.eq.s32.totalorder %s24, 0
      %p85 = por %p83, %p84
      %p86 = scmp.ne.s32.totalorder %s72, %s73
      %p87 = scmp.eq.s32.totalorder %s25, 3
      %p88 = por %p86, %p87
      %p90 = scmp.ne.s32.totalorder %s73, %s89
      %p91 = scmp.eq.s32.totalorder %s25, 0
      %p92 = por %p90, %p91
      %s94 = sadd.s32 %s93, 1
      %p97 = scmp.eq.s32.totalorder %s19, 3
      %p98 = scmp.ne.s32.totalorder %s93, %s95
      %p99 = scmp.eq.s32.totalorder %s19, 0
      %p100 = por %p98, %p99
      %p101 = scmp.ne.s32.totalorder %s93, %s95
      %p102 = scmp.eq.s32.totalorder %s24, 3
      %p103 = por %p101, %p102
      %p104 = scmp.ne.s32.totalorder %s95, %s96
      %p105 = scmp.eq.s32.totalorder %s24, 0
      %p106 = por %p104, %p105
      %p107 = scmp.ne.s32.totalorder %s95, %s96
      %p108 = scmp.eq.s32.totalorder %s25, 3
      %p109 = por %p107, %p108
      %p111 = scmp.ne.s32.totalorder %s96, %s110
      %p112 = scmp.eq.s32.totalorder %s25, 0
      %p113 = por %p111, %p112
      %s115 = sadd.s32 %s114, 1
      %p118 = scmp.eq.s32.totalorder %s19, 3
      %p119 = scmp.ne.s32.totalorder %s114, %s116
      %p120 = scmp.eq.s32.totalorder %s19, 0
      %p121 = por %p119, %p120
      %p122 = scmp.ne.s32.totalorder %s114, %s116
      %p123 = scmp.eq.s32.totalorder %s24, 3
      %p124 = por %p122, %p123
      %p125 = scmp.ne.s32.totalorder %s116, %s117
      %p126 = scmp.eq.s32.totalorder %s24, 0
      %p127 = por %p125, %p126
      %p128 = scmp.ne.s32.totalorder %s116, %s117
      %p129 = scmp.eq.s32.totalorder %s25, 3
      %p130 = por %p128, %p129
      %p132 = scmp.ne.s32.totalorder %s117, %s131
      %p133 = scmp.eq.s32.totalorder %s25, 0
      %p134 = por %p132, %p133
      %s136 = sadd.s32 %s135, 1
      %p139 = scmp.eq.s32.totalorder %s19, 3
      %p140 = scmp.ne.s32.totalorder %s135, %s137
      %p141 = scmp.eq.s32.totalorder %s19, 0
      %p142 = por %p140, %p141
      %p143 = scmp.ne.s32.totalorder %s135, %s137
      %p144 = scmp.eq.s32.totalorder %s24, 3
      %p145 = por %p143, %p144
      %p146 = scmp.ne.s32.totalorder %s137, %s138
      %p147 = scmp.eq.s32.totalorder %s24, 0
      %p148 = por %p146, %p147
      %p149 = scmp.ne.s32.totalorder %s137, %s138
      %p150 = scmp.eq.s32.totalorder %s25, 3
      %p151 = por %p149, %p150
      %p153 = scmp.ne.s32.totalorder %s138, %s152
      %p154 = scmp.eq.s32.totalorder %s25, 0
      %p155 = por %p153, %p154
      %s157 = sadd.s32 %s156, 1
      %p160 = scmp.eq.s32.totalorder %s19, 3
      %p161 = scmp.ne.s32.totalorder %s156, %s158
      %p162 = scmp.eq.s32.totalorder %s19, 0
      %p163 = por %p161, %p162
      %p164 = scmp.ne.s32.totalorder %s156, %s158
      %p165 = scmp.eq.s32.totalorder %s24, 3
      %p166 = por %p164, %p165
      %p167 = scmp.ne.s32.totalorder %s158, %s159
      %p168 = scmp.eq.s32.totalorder %s24, 0
      %p169 = por %p167, %p168
      %p170 = scmp.ne.s32.totalorder %s158, %s159
      %p171 = scmp.eq.s32.totalorder %s25, 3
      %p172 = por %p170, %p171
      %p174 = scmp.ne.s32.totalorder %s159, %s173
      %p175 = scmp.eq.s32.totalorder %s25, 0
      %p176 = por %p174, %p175
      %s178 = sadd.s32 %s177, 1
      %p181 = scmp.eq.s32.totalorder %s19, 3
      %p182 = scmp.ne.s32.totalorder %s177, %s179
      %p183 = scmp.eq.s32.totalorder %s19, 0
      %p184 = por %p182, %p183
      %p185 = scmp.ne.s32.totalorder %s177, %s179
      %p186 = scmp.eq.s32.totalorder %s24, 3
      %p187 = por %p185, %p186
      %p188 = scmp.ne.s32.totalorder %s179, %s180
      %p189 = scmp.eq.s32.totalorder %s24, 0
      %p190 = por %p188, %p189
      %p191 = scmp.ne.s32.totalorder %s179, %s180
      %p192 = scmp.eq.s32.totalorder %s25, 3
      %p193 = por %p191, %p192
      %p195 = scmp.ne.s32.totalorder %s180, %s194
      %p196 = scmp.eq.s32.totalorder %s25, 0
      %p197 = por %p195, %p196
      %s199 = sadd.s32 %s198, 1
      %p202 = scmp.eq.s32.totalorder %s19, 3
      %p203 = scmp.ne.s32.totalorder %s198, %s200
      %p204 = scmp.eq.s32.totalorder %s19, 0
      %p205 = por %p203, %p204
      %p206 = scmp.ne.s32.totalorder %s198, %s200
      %p207 = scmp.eq.s32.totalorder %s24, 3
      %p208 = por %p206, %p207
      %p209 = scmp.ne.s32.totalorder %s200, %s201
      %p210 = scmp.eq.s32.totalorder %s24, 0
      %p211 = por %p209, %p210
      %p212 = scmp.ne.s32.totalorder %s200, %s201
      %p213 = scmp.eq.s32.totalorder %s25, 3
      %p214 = por %p212, %p213
      %p216 = scmp.ne.s32.totalorder %s201, %s215
      %p217 = scmp.eq.s32.totalorder %s25, 0
      %p218 = por %p216, %p217
      %s220 = sadd.s32 %s219, 1
      %p223 = scmp.eq.s32.totalorder %s19, 3
      %p224 = scmp.ne.s32.totalorder %s219, %s221
      %p225 = scmp.eq.s32.totalorder %s19, 0
      %p226 = por %p224, %p225
      %p227 = scmp.ne.s32.totalorder %s219, %s221
      %p228 = scmp.eq.s32.totalorder %s24, 3
      %p229 = por %p227, %p228
      %p230 = scmp.ne.s32.totalorder %s221, %s222
      %p231 = scmp.eq.s32.totalorder %s24, 0
      %p232 = por %p230, %p231
      %p233 = scmp.ne.s32.totalorder %s221, %s222
      %p234 = scmp.eq.s32.totalorder %s25, 3
      %p235 = por %p233, %p234
      %p237 = scmp.ne.s32.totalorder %s222, %s236
      %p238 = scmp.eq.s32.totalorder %s25, 0
      %p239 = por %p237, %p238
      %s241 = sadd.s32 %s240, 1
      %p244 = scmp.eq.s32.totalorder %s19, 3
      %p245 = scmp.ne.s32.totalorder %s240, %s242
      %p246 = scmp.eq.s32.totalorder %s19, 0
      %p247 = por %p245, %p246
      %p248 = scmp.ne.s32.totalorder %s240, %s242
      %p249 = scmp.eq.s32.totalorder %s24, 3
      %p250 = por %p248, %p249
      %p251 = scmp.ne.s32.totalorder %s242, %s243
      %p252 = scmp.eq.s32.totalorder %s24, 0
      %p253 = por %p251, %p252
      %p254 = scmp.ne.s32.totalorder %s242, %s243
      %p255 = scmp.eq.s32.totalorder %s25, 3
      %p256 = por %p254, %p255
      %p258 = scmp.ne.s32.totalorder %s243, %s257
      %p259 = scmp.eq.s32.totalorder %s25, 0
      %p260 = por %p258, %p259
      %s261 = ssub.s32 %s26, %s38
      %s262 = ssub.s32 %s27, %s34
      %s263 = sor.u32 %s261, %s262
      %p264 = scmp.eq.s32.totalorder %s263, 0
      %s266 = sadd.s32 %s265, 1
      %s267 = scalar_select %p264, %s265, %s266
      %p270 = pneg %p264
      %p271 = scmp.eq.s32.totalorder %s19, 3
      %p272 = por %p270, %p271
      %p273 = scmp.ne.s32.totalorder %s265, %s268
      %p274 = scmp.eq.s32.totalorder %s19, 0
      %p275 = por %p273, %p274
      %p276 = scmp.ne.s32.totalorder %s265, %s268
      %p277 = scmp.eq.s32.totalorder %s24, 3
      %p278 = por %p276, %p277
      %p279 = scmp.ne.s32.totalorder %s268, %s269
      %p280 = scmp.eq.s32.totalorder %s24, 0
      %p281 = por %p279, %p280
      %p282 = scmp.ne.s32.totalorder %s268, %s269
      %p283 = scmp.eq.s32.totalorder %s25, 3
      %p284 = por %p282, %p283
      %p286 = scmp.ne.s32.totalorder %s269, %s285
      %p287 = scmp.eq.s32.totalorder %s25, 0
      %p288 = por %p286, %p287
      %p289 = scmp.le.s32.totalorder 1, %s19
      %p290 = scmp.lt.s32.totalorder %s19, 5
      %p291 = pnand %p289, %p290
      %p292 = pneg %p291
      // Predicated region
      $region9: #{tpu_custom_call.1} parent=5 // pred_check
        _
      $region10: #{tpu_custom_call.1} parent=5 // pred_check_branch
        %294 = sbr.rel (%p291) target = $region12
      $region11: #{tpu_custom_call.1} parent=5 // pred_region
        %s295 = ssub.s32 %s19, 1
        // Predicated region
        $region13: #{tpu_custom_call.1} parent=11 // pred_check
          %p296 = pneg %p106
        $region14: #{tpu_custom_call.1} parent=11 // pred_check_branch
          %298 = sbr.rel (%p296) target = $region16
        $region15: #{tpu_custom_call.1} parent=11 // pred_region
          _
        $region16: #{tpu_custom_call.1} parent=11 // pred_fallthru
          _
        // Predicated region
        $region17: #{tpu_custom_call.1} parent=11 // pred_check
          %p299 = pneg %p127
        $region18: #{tpu_custom_call.1} parent=11 // pred_check_branch
          %301 = sbr.rel (%p299) target = $region20
        $region19: #{tpu_custom_call.1} parent=11 // pred_region
          _
        $region20: #{tpu_custom_call.1} parent=11 // pred_fallthru
          _
        // Predicated region
        $region21: #{tpu_custom_call.1} parent=11 // pred_check
          %p302 = pneg %p148
        $region22: #{tpu_custom_call.1} parent=11 // pred_check_branch
          %304 = sbr.rel (%p302) target = $region24
        $region23: #{tpu_custom_call.1} parent=11 // pred_region
          _
        $region24: #{tpu_custom_call.1} parent=11 // pred_fallthru
          _
        // Predicated region
        $region25: #{tpu_custom_call.1} parent=11 // pred_check
          %p305 = pneg %p169
        $region26: #{tpu_custom_call.1} parent=11 // pred_check_branch
          %307 = sbr.rel (%p305) target = $region28
        $region27: #{tpu_custom_call.1} parent=11 // pred_region
          _
        $region28: #{tpu_custom_call.1} parent=11 // pred_fallthru
          _
        // Predicated region
        $region29: #{tpu_custom_call.1} parent=11 // pred_check
          %p308 = pneg %p190
        $region30: #{tpu_custom_call.1} parent=11 // pred_check_branch
          %310 = sbr.rel (%p308) target = $region32
        $region31: #{tpu_custom_call.1} parent=11 // pred_region
          _
        $region32: #{tpu_custom_call.1} parent=11 // pred_fallthru
          _
        // Predicated region
        $region33: #{tpu_custom_call.1} parent=11 // pred_check
          %p311 = pneg %p211
        $region34: #{tpu_custom_call.1} parent=11 // pred_check_branch
          %313 = sbr.rel (%p311) target = $region36
        $region35: #{tpu_custom_call.1} parent=11 // pred_region
          _
        $region36: #{tpu_custom_call.1} parent=11 // pred_fallthru
          _
        // Predicated region
        $region37: #{tpu_custom_call.1} parent=11 // pred_check
          %p314 = pneg %p232
        $region38: #{tpu_custom_call.1} parent=11 // pred_check_branch
          %316 = sbr.rel (%p314) target = $region40
        $region39: #{tpu_custom_call.1} parent=11 // pred_region
          _
        $region40: #{tpu_custom_call.1} parent=11 // pred_fallthru
          _
        // Predicated region
        $region41: #{tpu_custom_call.1} parent=11 // pred_check
          %p317 = pneg %p253
        $region42: #{tpu_custom_call.1} parent=11 // pred_check_branch
          %319 = sbr.rel (%p317) target = $region44
        $region43: #{tpu_custom_call.1} parent=11 // pred_region
          _
        $region44: #{tpu_custom_call.1} parent=11 // pred_fallthru
          _
      $region12: #{tpu_custom_call.1} parent=5 // pred_fallthru
        _
      %p320 = scmp.lt.s32.totalorder %s19, 4
      // Predicated region
      $region45: #{tpu_custom_call.1} parent=5 // pred_check
        %p321 = pneg %p320
      $region46: #{tpu_custom_call.1} parent=5 // pred_check_branch
        %323 = sbr.rel (%p321) target = $region48
      $region47: #{tpu_custom_call.1} parent=5 // pred_region
        // Predicated region
        $region49: #{tpu_custom_call.1} parent=47 // pred_check
          %p324 = pneg %p53
        $region50: #{tpu_custom_call.1} parent=47 // pred_check_branch
          %326 = sbr.rel (%p324) target = $region52
        $region51: #{tpu_custom_call.1} parent=47 // pred_region
          %p327 = scmp.lt.s32.totalorder %s26, 1
          %s328 = scalar_select %p327, %s26, 1
          %p329 = scmp.lt.s32.totalorder %s27, 1
          %s330 = scalar_select %p329, %s27, 1
          %s331 = smul.addr %s328, 2
          %s332 = sadd.s32 %s330, %s331
          %s333 = smul.addr %s332, 4
          %s334 = scalar_lea.vmem %s0, %s333
        $region52: #{tpu_custom_call.1} parent=47 // pred_fallthru
          _
        // Predicated region
        $region53: #{tpu_custom_call.1} parent=47 // pred_check
          %p335 = pneg %p79
        $region54: #{tpu_custom_call.1} parent=47 // pred_check_branch
          %337 = sbr.rel (%p335) target = $region56
        $region55: #{tpu_custom_call.1} parent=47 // pred_region
          %p338 = scmp.lt.s32.totalorder %s26, 1
          %s339 = scalar_select %p338, %s26, 1
          %s340 = smul.addr %s339, 4
          %s341 = smul.addr %s340, 8
          %s342 = scalar_lea.vmem %s1, %s341
        $region56: #{tpu_custom_call.1} parent=47 // pred_fallthru
          _
      $region48: #{tpu_custom_call.1} parent=5 // pred_fallthru
        _
      %p343 = scmp.le.s32.totalorder 1, %s19
      %p344 = scmp.lt.s32.totalorder %s19, 5
      %p345 = pnand %p343, %p344
      %p346 = pneg %p345
      // Predicated region
      $region57: #{tpu_custom_call.1} parent=5 // pred_check
        _
      $region58: #{tpu_custom_call.1} parent=5 // pred_check_branch
        %348 = sbr.rel (%p345) target = $region60
      $region59: #{tpu_custom_call.1} parent=5 // pred_region
        %s349 = ssub.s32 %s19, 1
        %p350 = scmp.lt.s32.totalorder %s28, 1
        %s351 = scalar_select %p350, %s28, 1
        %p352 = scmp.lt.s32.totalorder %s29, 1
        %s353 = scalar_select %p352, %s29, 1
        %s354 = smul.addr %s351, 2
        %s355 = sadd.s32 %s353, %s354
        %s356 = smul.addr %s355, 4
        %s357 = scalar_lea.vmem %s0, %s356
        %p358 = pneg %p59
        %p359 = pneg %p56
        %p360 = scmp.lt.s32.totalorder %s28, 1
        %s361 = scalar_select %p360, %s28, 1
        %s362 = smul.addr %s361, 4
        %s363 = smul.addr %s362, 8
        %s364 = scalar_lea.vmem %s1, %s363
        %p365 = pneg %p85
        %p366 = pneg %p82
        %p367 = pneg %p106
        %p368 = pneg %p103
        %p369 = pneg %p127
        %p370 = pneg %p124
        %p371 = pneg %p148
        %p372 = pneg %p145
        %p373 = pneg %p169
        %p374 = pneg %p166
        %p375 = pneg %p190
        %p376 = pneg %p187
        %p377 = pneg %p211
        %p378 = pneg %p208
        %p379 = pneg %p232
        %p380 = pneg %p229
        %p381 = pneg %p253
        %p382 = pneg %p250
        %p383 = pneg %p281
        %p384 = pneg %p278
        %s385 = sand.u32 %s268, 1
        %s386 = scalar_lea.sflag [#allocation5], %s385
        %s387 = sand.u32 %s268, 1
        %s388 = smul.addr %s387, 4
        %s389 = scalar_lea.vmem [#allocation4], %s388
        %p390 = scmp.lt.s32.totalorder %s28, 1
        %s391 = scalar_select %p390, %s28, 1
        %p392 = scmp.lt.s32.totalorder %s29, 1
        %s393 = scalar_select %p392, %s29, 1
        %s394 = smul.addr %s391, 2
        %s395 = sadd.s32 %s393, %s394
        %s396 = smul.addr %s395, 4
        %s397 = scalar_lea.vmem %s0, %s396
        %p398 = scmp.lt.s32.totalorder %s28, 1
        %s399 = scalar_select %p398, %s28, 1
        %s400 = smul.addr %s399, 4
        %s401 = smul.addr %s400, 8
        %s402 = scalar_lea.vmem %s1, %s401
        %p403 = scmp.eq.s32.totalorder %s29, 0
        // Predicated region
        $region61: #{tpu_custom_call.1} parent=59 // pred_check
          %p404 = pneg %p403
        $region62: #{tpu_custom_call.1} parent=59 // pred_check_branch
          %406 = sbr.rel (%p404) target = $region64
        $region63: #{tpu_custom_call.1} parent=59 // pred_region
          %v407 = vld [vmem:[%s402] sm:$0xff]
          %v408 = vld [vmem:[%s402 + $0x8] sm:$0xff]
          %v409 = vld [vmem:[%s402 + $0x10] sm:$0xff]
          %v410 = vld [vmem:[%s402 + $0x18] sm:$0xff]
          %v411 = vld [vmem:[%s4] sm:$0xf]
          %v412 = vld [vmem:[%s5] sm:$0xf]
          %414 = vset.pattern.permute.xlu0 0
          %415 = vperm.xlu0 %414, %v412
          %v416 = vpop.permute.xlu0 %415
          %vm418 = vcmask 261120
          %v420 = vsel %vm418, %v411, 0
          %422 = vmatprep.subr.mxu0 0.0
          %423 = vmatpush1.msra.mxu0 %v407
          %424 = vmatprep.subr.mxu0 0.0
          %425 = vmatpush1.msra.mxu0 %v408
          %426 = vmatprep.subr.mxu0 0.0
          %427 = vmatpush1.msra.mxu0 %v409
          %428 = vmatprep.subr.mxu0 0.0
          %429 = vmatpush1.msra.mxu0 %v410
          %430 = vmatprep.subr.mxu0 0.0
          %431 = vmatpush1.msra.mxu0 0.0
          %432 = vmatprep.subr.mxu0 0.0
          %433 = vmatpush1.msra.mxu0 0.0
          %434 = vmatprep.subr.mxu0 0.0
          %435 = vmatpush1.msra.mxu0 0.0
          %436 = vmatprep.subr.mxu0 0.0
          %437 = vmatpush1.msra.mxu0 0.0
          %438 = vmatprep.subr.mxu0 0.0
          %439 = vmatpush1.msra.mxu0 0.0
          %440 = vmatprep.subr.mxu0 0.0
          %441 = vmatpush1.msra.mxu0 0.0
          %442 = vmatprep.subr.mxu0 0.0
          %443 = vmatpush1.msra.mxu0 0.0
          %444 = vmatprep.subr.mxu0 0.0
          %445 = vmatpush1.msra.mxu0 0.0
          %446 = vmatprep.subr.mxu0 0.0
          %447 = vmatpush1.msra.mxu0 0.0
          %448 = vmatprep.subr.mxu0 0.0
          %449 = vmatpush1.msra.mxu0 0.0
          %450 = vmatprep.subr.mxu0 0.0
          %451 = vmatpush1.msra.mxu0 0.0
          %452 = vmatprep.subr.mxu0 0.0
          %453 = vmatpush1.msra.mxu0 0.0
          %454 = vmatprep.subr.mxu0 0.0
          %455 = vmatpush1.msra.mxu0 0.0
          %456 = vmatprep.subr.mxu0 0.0
          %457 = vmatpush1.msra.mxu0 0.0
          %458 = vmatprep.subr.mxu0 0.0
          %459 = vmatpush1.msra.mxu0 0.0
          %460 = vmatprep.subr.mxu0 0.0
          %461 = vmatpush1.msra.mxu0 0.0
          %462 = vmatprep.subr.mxu0 0.0
          %463 = vmatpush1.msra.mxu0 0.0
          %464 = vmatprep.subr.mxu0 0.0
          %465 = vmatpush1.msra.mxu0 0.0
          %466 = vmatprep.subr.mxu0 0.0
          %467 = vmatpush1.msra.mxu0 0.0
          %468 = vmatprep.subr.mxu0 0.0
          %469 = vmatpush1.msra.mxu0 0.0
          %470 = vmatprep.subr.mxu0 0.0
          %471 = vmatpush1.msra.mxu0 0.0
          %472 = vmatprep.subr.mxu0 0.0
          %473 = vmatpush1.msra.mxu0 0.0
          %474 = vmatprep.subr.mxu0 0.0
          %475 = vmatpush1.msra.mxu0 0.0
          %476 = vmatprep.subr.mxu0 0.0
          %477 = vmatpush1.msra.mxu0 0.0
          %478 = vmatprep.subr.mxu0 0.0
          %479 = vmatpush1.msra.mxu0 0.0
          %480 = vmatprep.subr.mxu0 0.0
          %481 = vmatpush1.msra.mxu0 0.0
          %482 = vmatprep.subr.mxu0 0.0
          %483 = vmatpush1.msra.mxu0 0.0
          %484 = vmatprep.subr.mxu0 0.0
          %485 = vmatpush1.msra.mxu0 0.0
          %486 = vmatprep.mubr.f32.mxu0 0.0
          %487 = vmatmul.mubr.f32.gmra.mrb[0].mxu0 %v420
          %v488 = vpop.f32.mrb[0].mxu0
          %v489 = vadd.f32 %v416, %v488
          %v490 = vpop.f32.mrb[0].mxu0
          %491 = vdwg.mxu0
          %v492 = vld [vmem:[%s6] sm:$0xf]
          %v493 = vld [vmem:[%s7] sm:$0xf]
          %495 = vset.pattern.permute.xlu0 0
          %496 = vperm.xlu0 %495, %v493
          %v497 = vpop.permute.xlu0 %496
          %v500 = vsel %vm418, %v492, 0
          %502 = vmatprep.subr.mxu0 0.0
          %503 = vmatpush1.msra.mxu0 %v407
          %504 = vmatprep.subr.mxu0 0.0
          %505 = vmatpush1.msra.mxu0 %v408
          %506 = vmatprep.subr.mxu0 0.0
          %507 = vmatpush1.msra.mxu0 %v409
          %508 = vmatprep.subr.mxu0 0.0
          %509 = vmatpush1.msra.mxu0 %v410
          %510 = vmatprep.subr.mxu0 0.0
          %511 = vmatpush1.msra.mxu0 0.0
          %512 = vmatprep.subr.mxu0 0.0
          %513 = vmatpush1.msra.mxu0 0.0
          %514 = vmatprep.subr.mxu0 0.0
          %515 = vmatpush1.msra.mxu0 0.0
          %516 = vmatprep.subr.mxu0 0.0
          %517 = vmatpush1.msra.mxu0 0.0
          %518 = vmatprep.subr.mxu0 0.0
          %519 = vmatpush1.msra.mxu0 0.0
          %520 = vmatprep.subr.mxu0 0.0
          %521 = vmatpush1.msra.mxu0 0.0
          %522 = vmatprep.subr.mxu0 0.0
          %523 = vmatpush1.msra.mxu0 0.0
          %524 = vmatprep.subr.mxu0 0.0
          %525 = vmatpush1.msra.mxu0 0.0
          %526 = vmatprep.subr.mxu0 0.0
          %527 = vmatpush1.msra.mxu0 0.0
          %528 = vmatprep.subr.mxu0 0.0
          %529 = vmatpush1.msra.mxu0 0.0
          %530 = vmatprep.subr.mxu0 0.0
          %531 = vmatpush1.msra.mxu0 0.0
          %532 = vmatprep.subr.mxu0 0.0
          %533 = vmatpush1.msra.mxu0 0.0
          %534 = vmatprep.subr.mxu0 0.0
          %535 = vmatpush1.msra.mxu0 0.0
          %536 = vmatprep.subr.mxu0 0.0
          %537 = vmatpush1.msra.mxu0 0.0
          %538 = vmatprep.subr.mxu0 0.0
          %539 = vmatpush1.msra.mxu0 0.0
          %540 = vmatprep.subr.mxu0 0.0
          %541 = vmatpush1.msra.mxu0 0.0
          %542 = vmatprep.subr.mxu0 0.0
          %543 = vmatpush1.msra.mxu0 0.0
          %544 = vmatprep.subr.mxu0 0.0
          %545 = vmatpush1.msra.mxu0 0.0
          %546 = vmatprep.subr.mxu0 0.0
          %547 = vmatpush1.msra.mxu0 0.0
          %548 = vmatprep.subr.mxu0 0.0
          %549 = vmatpush1.msra.mxu0 0.0
          %550 = vmatprep.subr.mxu0 0.0
          %551 = vmatpush1.msra.mxu0 0.0
          %552 = vmatprep.subr.mxu0 0.0
          %553 = vmatpush1.msra.mxu0 0.0
          %554 = vmatprep.subr.mxu0 0.0
          %555 = vmatpush1.msra.mxu0 0.0
          %556 = vmatprep.subr.mxu0 0.0
          %557 = vmatpush1.msra.mxu0 0.0
          %558 = vmatprep.subr.mxu0 0.0
          %559 = vmatpush1.msra.mxu0 0.0
          %560 = vmatprep.subr.mxu0 0.0
          %561 = vmatpush1.msra.mxu0 0.0
          %562 = vmatprep.subr.mxu0 0.0
          %563 = vmatpush1.msra.mxu0 0.0
          %564 = vmatprep.subr.mxu0 0.0
          %565 = vmatpush1.msra.mxu0 0.0
          %566 = vmatprep.mubr.f32.mxu0 0.0
          %567 = vmatmul.mubr.f32.gmra.mrb[0].mxu0 %v500
          %v568 = vpop.f32.mrb[0].mxu0
          %v569 = vadd.f32 %v497, %v568
          %v570 = vpop.f32.mrb[0].mxu0
          %571 = vdwg.mxu0
          %vm572 = vcmask 60416
          %573 = vst.msk [vmem:[#allocation2] sm:$0xf] %vm572, %v489
          %574 = vst.msk [vmem:[#allocation3] sm:$0xf] %vm572, %v569
        $region64: #{tpu_custom_call.1} parent=59 // pred_fallthru
          _
        %v575 = vld [vmem:[%s397] sm:$0xf]
        %v576 = vld [vmem:[%s2] sm:$0xf]
        %v577 = vld [vmem:[%s3] sm:$0xf]
        %579 = vset.pattern.permute.xlu0 0
        %580 = vperm.xlu0 %579, %v577
        %v581 = vpop.permute.xlu0 %580
        %vm583 = vcmask 31744
        %v585 = vsel %vm583, %v576, 0
        %vm587 = vcmask 1043456
        %v589 = vsel %vm587, %v575, 0
        %591 = vmatprep.subr.mxu0 0.0
        %592 = vmatpush1.msra.mxu0 %v589
        %593 = vmatprep.subr.mxu0 0.0
        %594 = vmatpush1.msra.mxu0 0.0
        %595 = vmatprep.subr.mxu0 0.0
        %596 = vmatpush1.msra.mxu0 0.0
        %597 = vmatprep.subr.mxu0 0.0
        %598 = vmatpush1.msra.mxu0 0.0
        %599 = vmatprep.subr.mxu0 0.0
        %600 = vmatpush1.msra.mxu0 0.0
        %601 = vmatprep.subr.mxu0 0.0
        %602 = vmatpush1.msra.mxu0 0.0
        %603 = vmatprep.subr.mxu0 0.0
        %604 = vmatpush1.msra.mxu0 0.0
        %605 = vmatprep.subr.mxu0 0.0
        %606 = vmatpush1.msra.mxu0 0.0
        %607 = vmatprep.subr.mxu0 0.0
        %608 = vmatpush1.msra.mxu0 0.0
        %609 = vmatprep.subr.mxu0 0.0
        %610 = vmatpush1.msra.mxu0 0.0
        %611 = vmatprep.subr.mxu0 0.0
        %612 = vmatpush1.msra.mxu0 0.0
        %613 = vmatprep.subr.mxu0 0.0
        %614 = vmatpush1.msra.mxu0 0.0
        %615 = vmatprep.subr.mxu0 0.0
        %616 = vmatpush1.msra.mxu0 0.0
        %617 = vmatprep.subr.mxu0 0.0
        %618 = vmatpush1.msra.mxu0 0.0
        %619 = vmatprep.subr.mxu0 0.0
        %620 = vmatpush1.msra.mxu0 0.0
        %621 = vmatprep.subr.mxu0 0.0
        %622 = vmatpush1.msra.mxu0 0.0
        %623 = vmatprep.subr.mxu0 0.0
        %624 = vmatpush1.msra.mxu0 0.0
        %625 = vmatprep.subr.mxu0 0.0
        %626 = vmatpush1.msra.mxu0 0.0
        %627 = vmatprep.subr.mxu0 0.0
        %628 = vmatpush1.msra.mxu0 0.0
        %629 = vmatprep.subr.mxu0 0.0
        %630 = vmatpush1.msra.mxu0 0.0
        %631 = vmatprep.subr.mxu0 0.0
        %632 = vmatpush1.msra.mxu0 0.0
        %633 = vmatprep.subr.mxu0 0.0
        %634 = vmatpush1.msra.mxu0 0.0
        %635 = vmatprep.subr.mxu0 0.0
        %636 = vmatpush1.msra.mxu0 0.0
        %637 = vmatprep.subr.mxu0 0.0
        %638 = vmatpush1.msra.mxu0 0.0
        %639 = vmatprep.subr.mxu0 0.0
        %640 = vmatpush1.msra.mxu0 0.0
        %641 = vmatprep.subr.mxu0 0.0
        %642 = vmatpush1.msra.mxu0 0.0
        %643 = vmatprep.subr.mxu0 0.0
        %644 = vmatpush1.msra.mxu0 0.0
        %645 = vmatprep.subr.mxu0 0.0
        %646 = vmatpush1.msra.mxu0 0.0
        %647 = vmatprep.subr.mxu0 0.0
        %648 = vmatpush1.msra.mxu0 0.0
        %649 = vmatprep.subr.mxu0 0.0
        %650 = vmatpush1.msra.mxu0 0.0
        %651 = vmatprep.subr.mxu0 0.0
        %652 = vmatpush1.msra.mxu0 0.0
        %653 = vmatprep.subr.mxu0 0.0
        %654 = vmatpush1.msra.mxu0 0.0
        %655 = vmatprep.mubr.f32.mxu0 0.0
        %656 = vmatmul.mubr.f32.gmra.mrb[0].mxu0 %v585
        %v657 = vpop.f32.mrb[0].mxu0
        %v658 = vadd.f32 %v581, %v657
        %v659 = vpop.f32.mrb[0].mxu0
        %660 = vdwg.mxu0
        %v663 = vunpack.c.l.s4 1983009808
        %v664 = vunpack.c.0.s8 %v663
        %v665 = vlaneseq
        %v666 = vshrl.u32 %v665, 7
        %v667 = vsub.s32 %v664, %v666
        %v668 = vrot.slane %v658, %v667
        %v669 = vcombine.high %v668, %v668
        %v670 = vld [vmem:[#allocation2] sm:$0xf]
        %v673 = vunpack.c.l.s4 1983009808
        %v674 = vunpack.c.0.s8 %v673
        %v675 = vlaneseq
        %v676 = vshrl.u32 %v675, 7
        %v677 = vsub.s32 %v674, %v676
        %v678 = vrot.slane %v670, %v677
        %v679 = vcombine.high %v678, %v678
        %v682 = vld [vmem:[#allocation3] sm:$0xf]
        %v685 = vunpack.c.l.s4 1983009808
        %v686 = vunpack.c.0.s8 %v685
        %v687 = vlaneseq
        %v688 = vshrl.u32 %v687, 7
        %v689 = vsub.s32 %v686, %v688
        %v690 = vrot.slane %v682, %v689
        %v691 = vcombine.high %v690, %v690
        %692 = vxpose.xlu0.b32.start [1/16] %v678, 128
        %693 = vxpose.xlu0.b32.cont [2/16] 0.0, 128
        %694 = vxpose.xlu0.b32.cont [3/16] 0.0, 128
        %695 = vxpose.xlu0.b32.cont [4/16] 0.0, 128
        %696 = vxpose.xlu0.b32.cont [5/16] 0.0, 128
        %697 = vxpose.xlu0.b32.cont [6/16] 0.0, 128
        %698 = vxpose.xlu0.b32.cont [7/16] 0.0, 128
        %699 = vxpose.xlu0.b32.cont [8/16] 0.0, 128
        %700 = vxpose.xlu0.b32.cont [9/16] 0.0, 128
        %701 = vxpose.xlu0.b32.cont [10/16] 0.0, 128
        %702 = vxpose.xlu0.b32.cont [11/16] 0.0, 128
        %703 = vxpose.xlu0.b32.cont [12/16] 0.0, 128
        %704 = vxpose.xlu0.b32.cont [13/16] 0.0, 128
        %705 = vxpose.xlu0.b32.cont [14/16] 0.0, 128
        %706 = vxpose.xlu0.b32.cont [15/16] 0.0, 128
        %707 = vxpose.xlu0.b32.end [16/16] 0.0, 128
        %v708 = vpop.trf.xlu0
        %v709 = vpop.trf.xlu0
        %v710 = vpop.trf.xlu0
        %v711 = vpop.trf.xlu0
        %v712 = vpop.trf.xlu0
        %v713 = vpop.trf.xlu0
        %v714 = vpop.trf.xlu0
        %v715 = vpop.trf.xlu0
        %v716 = vpop.trf.xlu0
        %v717 = vpop.trf.xlu0
        %v718 = vpop.trf.xlu0
        %v719 = vpop.trf.xlu0
        %v720 = vpop.trf.xlu0
        %v721 = vpop.trf.xlu0
        %v722 = vpop.trf.xlu0
        %v723 = vpop.trf.xlu0
        %vm724 = vcmask 15360
        %v726 = vsel %vm724, %v708, 0
        %vm728 = vcmask 1041408
        %v729 = vsel %vm728, %v668, 0
        %731 = vmatprep.subr.mxu0 0.0
        %732 = vmatpush1.msra.mxu0 %v729
        %733 = vmatprep.subr.mxu0 0.0
        %734 = vmatpush1.msra.mxu0 0.0
        %735 = vmatprep.subr.mxu0 0.0
        %736 = vmatpush1.msra.mxu0 0.0
        %737 = vmatprep.subr.mxu0 0.0
        %738 = vmatpush1.msra.mxu0 0.0
        %739 = vmatprep.subr.mxu0 0.0
        %740 = vmatpush1.msra.mxu0 0.0
        %741 = vmatprep.subr.mxu0 0.0
        %742 = vmatpush1.msra.mxu0 0.0
        %743 = vmatprep.subr.mxu0 0.0
        %744 = vmatpush1.msra.mxu0 0.0
        %745 = vmatprep.subr.mxu0 0.0
        %746 = vmatpush1.msra.mxu0 0.0
        %747 = vmatprep.subr.mxu0 0.0
        %748 = vmatpush1.msra.mxu0 0.0
        %749 = vmatprep.subr.mxu0 0.0
        %750 = vmatpush1.msra.mxu0 0.0
        %751 = vmatprep.subr.mxu0 0.0
        %752 = vmatpush1.msra.mxu0 0.0
        %753 = vmatprep.subr.mxu0 0.0
        %754 = vmatpush1.msra.mxu0 0.0
        %755 = vmatprep.subr.mxu0 0.0
        %756 = vmatpush1.msra.mxu0 0.0
        %757 = vmatprep.subr.mxu0 0.0
        %758 = vmatpush1.msra.mxu0 0.0
        %759 = vmatprep.subr.mxu0 0.0
        %760 = vmatpush1.msra.mxu0 0.0
        %761 = vmatprep.subr.mxu0 0.0
        %762 = vmatpush1.msra.mxu0 0.0
        %763 = vmatprep.subr.mxu0 0.0
        %764 = vmatpush1.msra.mxu0 0.0
        %765 = vmatprep.subr.mxu0 0.0
        %766 = vmatpush1.msra.mxu0 0.0
        %767 = vmatprep.subr.mxu0 0.0
        %768 = vmatpush1.msra.mxu0 0.0
        %769 = vmatprep.subr.mxu0 0.0
        %770 = vmatpush1.msra.mxu0 0.0
        %771 = vmatprep.subr.mxu0 0.0
        %772 = vmatpush1.msra.mxu0 0.0
        %773 = vmatprep.subr.mxu0 0.0
        %774 = vmatpush1.msra.mxu0 0.0
        %775 = vmatprep.subr.mxu0 0.0
        %776 = vmatpush1.msra.mxu0 0.0
        %777 = vmatprep.subr.mxu0 0.0
        %778 = vmatpush1.msra.mxu0 0.0
        %779 = vmatprep.subr.mxu0 0.0
        %780 = vmatpush1.msra.mxu0 0.0
        %781 = vmatprep.subr.mxu0 0.0
        %782 = vmatpush1.msra.mxu0 0.0
        %783 = vmatprep.subr.mxu0 0.0
        %784 = vmatpush1.msra.mxu0 0.0
        %785 = vmatprep.subr.mxu0 0.0
        %786 = vmatpush1.msra.mxu0 0.0
        %787 = vmatprep.subr.mxu0 0.0
        %788 = vmatpush1.msra.mxu0 0.0
        %789 = vmatprep.subr.mxu0 0.0
        %790 = vmatpush1.msra.mxu0 0.0
        %791 = vmatprep.subr.mxu0 0.0
        %792 = vmatpush1.msra.mxu0 0.0
        %793 = vmatprep.subr.mxu0 0.0
        %794 = vmatpush1.msra.mxu0 0.0
        %795 = vmatprep.mubr.f32.mxu0 0.0
        %796 = vmatmul.mubr.f32.gmra.mrb[0].mxu0 %v726
        %v797 = vpop.f32.mrb[0].mxu0
        %v798 = vadd.f32 0.0, %v797
        %v799 = vpop.f32.mrb[0].mxu0
        %800 = vdwg.mxu0
        %801 = vxpose.xlu0.b32.start [1/16] %v679, 128
        %802 = vxpose.xlu0.b32.cont [2/16] 0.0, 128
        %803 = vxpose.xlu0.b32.cont [3/16] 0.0, 128
        %804 = vxpose.xlu0.b32.cont [4/16] 0.0, 128
        %805 = vxpose.xlu0.b32.cont [5/16] 0.0, 128
        %806 = vxpose.xlu0.b32.cont [6/16] 0.0, 128
        %807 = vxpose.xlu0.b32.cont [7/16] 0.0, 128
        %808 = vxpose.xlu0.b32.cont [8/16] 0.0, 128
        %809 = vxpose.xlu0.b32.cont [9/16] 0.0, 128
        %810 = vxpose.xlu0.b32.cont [10/16] 0.0, 128
        %811 = vxpose.xlu0.b32.cont [11/16] 0.0, 128
        %812 = vxpose.xlu0.b32.cont [12/16] 0.0, 128
        %813 = vxpose.xlu0.b32.cont [13/16] 0.0, 128
        %814 = vxpose.xlu0.b32.cont [14/16] 0.0, 128
        %815 = vxpose.xlu0.b32.cont [15/16] 0.0, 128
        %816 = vxpose.xlu0.b32.end [16/16] 0.0, 128
        %v817 = vpop.trf.xlu0
        %v818 = vpop.trf.xlu0
        %v819 = vpop.trf.xlu0
        %v820 = vpop.trf.xlu0
        %v821 = vpop.trf.xlu0
        %v822 = vpop.trf.xlu0
        %v823 = vpop.trf.xlu0
        %v824 = vpop.trf.xlu0
        %v825 = vpop.trf.xlu0
        %v826 = vpop.trf.xlu0
        %v827 = vpop.trf.xlu0
        %v828 = vpop.trf.xlu0
        %v829 = vpop.trf.xlu0
        %v830 = vpop.trf.xlu0
        %v831 = vpop.trf.xlu0
        %v832 = vpop.trf.xlu0
        %v834 = vsel %vm724, %v817, 0
        %v836 = vsel %vm728, %v669, 0
        %838 = vmatprep.subr.mxu0 0.0
        %839 = vmatpush1.msra.mxu0 %v836
        %840 = vmatprep.subr.mxu0 0.0
        %841 = vmatpush1.msra.mxu0 0.0
        %842 = vmatprep.subr.mxu0 0.0
        %843 = vmatpush1.msra.mxu0 0.0
        %844 = vmatprep.subr.mxu0 0.0
        %845 = vmatpush1.msra.mxu0 0.0
        %846 = vmatprep.subr.mxu0 0.0
        %847 = vmatpush1.msra.mxu0 0.0
        %848 = vmatprep.subr.mxu0 0.0
        %849 = vmatpush1.msra.mxu0 0.0
        %850 = vmatprep.subr.mxu0 0.0
        %851 = vmatpush1.msra.mxu0 0.0
        %852 = vmatprep.subr.mxu0 0.0
        %853 = vmatpush1.msra.mxu0 0.0
        %854 = vmatprep.subr.mxu0 0.0
        %855 = vmatpush1.msra.mxu0 0.0
        %856 = vmatprep.subr.mxu0 0.0
        %857 = vmatpush1.msra.mxu0 0.0
        %858 = vmatprep.subr.mxu0 0.0
        %859 = vmatpush1.msra.mxu0 0.0
        %860 = vmatprep.subr.mxu0 0.0
        %861 = vmatpush1.msra.mxu0 0.0
        %862 = vmatprep.subr.mxu0 0.0
        %863 = vmatpush1.msra.mxu0 0.0
        %864 = vmatprep.subr.mxu0 0.0
        %865 = vmatpush1.msra.mxu0 0.0
        %866 = vmatprep.subr.mxu0 0.0
        %867 = vmatpush1.msra.mxu0 0.0
        %868 = vmatprep.subr.mxu0 0.0
        %869 = vmatpush1.msra.mxu0 0.0
        %870 = vmatprep.subr.mxu0 0.0
        %871 = vmatpush1.msra.mxu0 0.0
        %872 = vmatprep.subr.mxu0 0.0
        %873 = vmatpush1.msra.mxu0 0.0
        %874 = vmatprep.subr.mxu0 0.0
        %875 = vmatpush1.msra.mxu0 0.0
        %876 = vmatprep.subr.mxu0 0.0
        %877 = vmatpush1.msra.mxu0 0.0
        %878 = vmatprep.subr.mxu0 0.0
        %879 = vmatpush1.msra.mxu0 0.0
        %880 = vmatprep.subr.mxu0 0.0
        %881 = vmatpush1.msra.mxu0 0.0
        %882 = vmatprep.subr.mxu0 0.0
        %883 = vmatpush1.msra.mxu0 0.0
        %884 = vmatprep.subr.mxu0 0.0
        %885 = vmatpush1.msra.mxu0 0.0
        %886 = vmatprep.subr.mxu0 0.0
        %887 = vmatpush1.msra.mxu0 0.0
        %888 = vmatprep.subr.mxu0 0.0
        %889 = vmatpush1.msra.mxu0 0.0
        %890 = vmatprep.subr.mxu0 0.0
        %891 = vmatpush1.msra.mxu0 0.0
        %892 = vmatprep.subr.mxu0 0.0
        %893 = vmatpush1.msra.mxu0 0.0
        %894 = vmatprep.subr.mxu0 0.0
        %895 = vmatpush1.msra.mxu0 0.0
        %896 = vmatprep.subr.mxu0 0.0
        %897 = vmatpush1.msra.mxu0 0.0
        %898 = vmatprep.subr.mxu0 0.0
        %899 = vmatpush1.msra.mxu0 0.0
        %900 = vmatprep.subr.mxu0 0.0
        %901 = vmatpush1.msra.mxu0 0.0
        %902 = vmatprep.mubr.f32.mxu0 0.0
        %903 = vmatmul.mubr.f32.gmra.mrb[0].mxu0 %v834
        %v904 = vpop.f32.mrb[0].mxu0
        %v905 = vadd.f32 0.0, %v904
        %v906 = vpop.f32.mrb[0].mxu0
        %907 = vdwg.mxu0
        %v908 = vrot.slane %v798, 4
        %v909 = vmax.f32 %v798, %v908
        %v910 = vrot.slane %v909, 2
        %v911 = vmax.f32 %v909, %v910
        %v912 = vrot.slane %v911, 1
        %v913 = vmax.f32 %v911, %v912
        %v914 = vrot.slane %v905, 4
        %v915 = vmax.f32 %v905, %v914
        %v916 = vrot.slane %v915, 2
        %v917 = vmax.f32 %v915, %v916
        %v918 = vrot.slane %v917, 1
        %v919 = vmax.f32 %v917, %v918
        %v920 = vsub.f32 %v798, %v913
        %v921 = vsub.f32 %v905, %v919
        %v922 = vmul.f32 %v920, 1.442695
        %v923 = vpow.pop %v922
        %v924 = vmul.f32 %v921, 1.442695
        %v925 = vpow.pop %v924
        %v926 = vrot.slane %v923, 4
        %v927 = vadd.f32 %v923, %v926
        %v928 = vrot.slane %v927, 2
        %v929 = vadd.f32 %v927, %v928
        %v930 = vrot.slane %v929, 1
        %v931 = vadd.f32 %v929, %v930
        %v932 = vrot.slane %v925, 4
        %v933 = vadd.f32 %v925, %v932
        %v934 = vrot.slane %v933, 2
        %v935 = vadd.f32 %v933, %v934
        %v936 = vrot.slane %v935, 1
        %v937 = vadd.f32 %v935, %v936
        %v938 = vrcp.pop %v931
        %v939 = vrcp.pop %v937
        %v940 = vmul.f32 %v923, %v938
        %v941 = vmul.f32 %v925, %v939
        %vm942 = vcmask 64512
        %v943 = vsel %vm942, %v690, 0
        %945 = vmatprep.subr.mxu0 0.0
        %946 = vmatpush1.msra.mxu0 %v940
        %947 = vmatprep.subr.mxu0 0.0
        %948 = vmatpush1.msra.mxu0 0.0
        %949 = vmatprep.subr.mxu0 0.0
        %950 = vmatpush1.msra.mxu0 0.0
        %951 = vmatprep.subr.mxu0 0.0
        %952 = vmatpush1.msra.mxu0 0.0
        %953 = vmatprep.subr.mxu0 0.0
        %954 = vmatpush1.msra.mxu0 0.0
        %955 = vmatprep.subr.mxu0 0.0
        %956 = vmatpush1.msra.mxu0 0.0
        %957 = vmatprep.subr.mxu0 0.0
        %958 = vmatpush1.msra.mxu0 0.0
        %959 = vmatprep.subr.mxu0 0.0
        %960 = vmatpush1.msra.mxu0 0.0
        %961 = vmatprep.subr.mxu0 0.0
        %962 = vmatpush1.msra.mxu0 0.0
        %963 = vmatprep.subr.mxu0 0.0
        %964 = vmatpush1.msra.mxu0 0.0
        %965 = vmatprep.subr.mxu0 0.0
        %966 = vmatpush1.msra.mxu0 0.0
        %967 = vmatprep.subr.mxu0 0.0
        %968 = vmatpush1.msra.mxu0 0.0
        %969 = vmatprep.subr.mxu0 0.0
        %970 = vmatpush1.msra.mxu0 0.0
        %971 = vmatprep.subr.mxu0 0.0
        %972 = vmatpush1.msra.mxu0 0.0
        %973 = vmatprep.subr.mxu0 0.0
        %974 = vmatpush1.msra.mxu0 0.0
        %975 = vmatprep.subr.mxu0 0.0
        %976 = vmatpush1.msra.mxu0 0.0
        %977 = vmatprep.subr.mxu0 0.0
        %978 = vmatpush1.msra.mxu0 0.0
        %979 = vmatprep.subr.mxu0 0.0
        %980 = vmatpush1.msra.mxu0 0.0
        %981 = vmatprep.subr.mxu0 0.0
        %982 = vmatpush1.msra.mxu0 0.0
        %983 = vmatprep.subr.mxu0 0.0
        %984 = vmatpush1.msra.mxu0 0.0
        %985 = vmatprep.subr.mxu0 0.0
        %986 = vmatpush1.msra.mxu0 0.0
        %987 = vmatprep.subr.mxu0 0.0
        %988 = vmatpush1.msra.mxu0 0.0
        %989 = vmatprep.subr.mxu0 0.0
        %990 = vmatpush1.msra.mxu0 0.0
        %991 = vmatprep.subr.mxu0 0.0
        %992 = vmatpush1.msra.mxu0 0.0
        %993 = vmatprep.subr.mxu0 0.0
        %994 = vmatpush1.msra.mxu0 0.0
        %995 = vmatprep.subr.mxu0 0.0
        %996 = vmatpush1.msra.mxu0 0.0
        %997 = vmatprep.subr.mxu0 0.0
        %998 = vmatpush1.msra.mxu0 0.0
        %999 = vmatprep.subr.mxu0 0.0
        %1000 = vmatpush1.msra.mxu0 0.0
        %1001 = vmatprep.subr.mxu0 0.0
        %1002 = vmatpush1.msra.mxu0 0.0
        %1003 = vmatprep.subr.mxu0 0.0
        %1004 = vmatpush1.msra.mxu0 0.0
        %1005 = vmatprep.subr.mxu0 0.0
        %1006 = vmatpush1.msra.mxu0 0.0
        %1007 = vmatprep.subr.mxu0 0.0
        %1008 = vmatpush1.msra.mxu0 0.0
        %1009 = vmatprep.mubr.f32.mxu0 0.0
        %1010 = vmatmul.mubr.f32.gmra.mrb[0].mxu0 %v943
        %v1011 = vpop.f32.mrb[0].mxu0
        %v1012 = vadd.f32 0.0, %v1011
        %v1013 = vpop.f32.mrb[0].mxu0
        %1014 = vdwg.mxu0
        %v1015 = vsel %vm942, %v691, 0
        %1017 = vmatprep.subr.mxu0 0.0
        %1018 = vmatpush1.msra.mxu0 %v941
        %1019 = vmatprep.subr.mxu0 0.0
        %1020 = vmatpush1.msra.mxu0 0.0
        %1021 = vmatprep.subr.mxu0 0.0
        %1022 = vmatpush1.msra.mxu0 0.0
        %1023 = vmatprep.subr.mxu0 0.0
        %1024 = vmatpush1.msra.mxu0 0.0
        %1025 = vmatprep.subr.mxu0 0.0
        %1026 = vmatpush1.msra.mxu0 0.0
        %1027 = vmatprep.subr.mxu0 0.0
        %1028 = vmatpush1.msra.mxu0 0.0
        %1029 = vmatprep.subr.mxu0 0.0
        %1030 = vmatpush1.msra.mxu0 0.0
        %1031 = vmatprep.subr.mxu0 0.0
        %1032 = vmatpush1.msra.mxu0 0.0
        %1033 = vmatprep.subr.mxu0 0.0
        %1034 = vmatpush1.msra.mxu0 0.0
        %1035 = vmatprep.subr.mxu0 0.0
        %1036 = vmatpush1.msra.mxu0 0.0
        %1037 = vmatprep.subr.mxu0 0.0
        %1038 = vmatpush1.msra.mxu0 0.0
        %1039 = vmatprep.subr.mxu0 0.0
        %1040 = vmatpush1.msra.mxu0 0.0
        %1041 = vmatprep.subr.mxu0 0.0
        %1042 = vmatpush1.msra.mxu0 0.0
        %1043 = vmatprep.subr.mxu0 0.0
        %1044 = vmatpush1.msra.mxu0 0.0
        %1045 = vmatprep.subr.mxu0 0.0
        %1046 = vmatpush1.msra.mxu0 0.0
        %1047 = vmatprep.subr.mxu0 0.0
        %1048 = vmatpush1.msra.mxu0 0.0
        %1049 = vmatprep.subr.mxu0 0.0
        %1050 = vmatpush1.msra.mxu0 0.0
        %1051 = vmatprep.subr.mxu0 0.0
        %1052 = vmatpush1.msra.mxu0 0.0
        %1053 = vmatprep.subr.mxu0 0.0
        %1054 = vmatpush1.msra.mxu0 0.0
        %1055 = vmatprep.subr.mxu0 0.0
        %1056 = vmatpush1.msra.mxu0 0.0
        %1057 = vmatprep.subr.mxu0 0.0
        %1058 = vmatpush1.msra.mxu0 0.0
        %1059 = vmatprep.subr.mxu0 0.0
        %1060 = vmatpush1.msra.mxu0 0.0
        %1061 = vmatprep.subr.mxu0 0.0
        %1062 = vmatpush1.msra.mxu0 0.0
        %1063 = vmatprep.subr.mxu0 0.0
        %1064 = vmatpush1.msra.mxu0 0.0
        %1065 = vmatprep.subr.mxu0 0.0
        %1066 = vmatpush1.msra.mxu0 0.0
        %1067 = vmatprep.subr.mxu0 0.0
        %1068 = vmatpush1.msra.mxu0 0.0
        %1069 = vmatprep.subr.mxu0 0.0
        %1070 = vmatpush1.msra.mxu0 0.0
        %1071 = vmatprep.subr.mxu0 0.0
        %1072 = vmatpush1.msra.mxu0 0.0
        %1073 = vmatprep.subr.mxu0 0.0
        %1074 = vmatpush1.msra.mxu0 0.0
        %1075 = vmatprep.subr.mxu0 0.0
        %1076 = vmatpush1.msra.mxu0 0.0
        %1077 = vmatprep.subr.mxu0 0.0
        %1078 = vmatpush1.msra.mxu0 0.0
        %1079 = vmatprep.subr.mxu0 0.0
        %1080 = vmatpush1.msra.mxu0 0.0
        %1081 = vmatprep.mubr.f32.mxu0 0.0
        %1082 = vmatmul.mubr.f32.gmra.mrb[0].mxu0 %v1015
        %v1083 = vpop.f32.mrb[0].mxu0
        %v1084 = vadd.f32 0.0, %v1083
        %v1085 = vpop.f32.mrb[0].mxu0
        %1086 = vdwg.mxu0
        %v1087 = vld [vmem:[%s8] sm:$0xf]
        %v1088 = vld [vmem:[%s9] sm:$0xf]
        %1090 = vset.pattern.permute.xlu0 0
        %1091 = vperm.xlu0 %1090, %v1088
        %v1092 = vpop.permute.xlu0 %1091
        %v1096 = vcombine.low %v1012, %v1084
        %v1098 = vunpack.c.l.s4 1983009808
        %v1099 = vunpack.c.0.s8 %v1098
        %v1100 = vlaneseq
        %v1101 = vshrl.u32 %v1100, 7
        %v1102 = vsub.s32 %v1099, %v1101
        %v1103 = vrot.slane %v1096, %v1102
        %v1105 = vsel %vm583, %v1087, 0
        %v1107 = vsel %vm587, %v1103, 0
        %1109 = vmatprep.subr.mxu0 0.0
        %1110 = vmatpush1.msra.mxu0 %v1107
        %1111 = vmatprep.subr.mxu0 0.0
        %1112 = vmatpush1.msra.mxu0 0.0
        %1113 = vmatprep.subr.mxu0 0.0
        %1114 = vmatpush1.msra.mxu0 0.0
        %1115 = vmatprep.subr.mxu0 0.0
        %1116 = vmatpush1.msra.mxu0 0.0
        %1117 = vmatprep.subr.mxu0 0.0
        %1118 = vmatpush1.msra.mxu0 0.0
        %1119 = vmatprep.subr.mxu0 0.0
        %1120 = vmatpush1.msra.mxu0 0.0
        %1121 = vmatprep.subr.mxu0 0.0
        %1122 = vmatpush1.msra.mxu0 0.0
        %1123 = vmatprep.subr.mxu0 0.0
        %1124 = vmatpush1.msra.mxu0 0.0
        %1125 = vmatprep.subr.mxu0 0.0
        %1126 = vmatpush1.msra.mxu0 0.0
        %1127 = vmatprep.subr.mxu0 0.0
        %1128 = vmatpush1.msra.mxu0 0.0
        %1129 = vmatprep.subr.mxu0 0.0
        %1130 = vmatpush1.msra.mxu0 0.0
        %1131 = vmatprep.subr.mxu0 0.0
        %1132 = vmatpush1.msra.mxu0 0.0
        %1133 = vmatprep.subr.mxu0 0.0
        %1134 = vmatpush1.msra.mxu0 0.0
        %1135 = vmatprep.subr.mxu0 0.0
        %1136 = vmatpush1.msra.mxu0 0.0
        %1137 = vmatprep.subr.mxu0 0.0
        %1138 = vmatpush1.msra.mxu0 0.0
        %1139 = vmatprep.subr.mxu0 0.0
        %1140 = vmatpush1.msra.mxu0 0.0
        %1141 = vmatprep.subr.mxu0 0.0
        %1142 = vmatpush1.msra.mxu0 0.0
        %1143 = vmatprep.subr.mxu0 0.0
        %1144 = vmatpush1.msra.mxu0 0.0
        %1145 = vmatprep.subr.mxu0 0.0
        %1146 = vmatpush1.msra.mxu0 0.0
        %1147 = vmatprep.subr.mxu0 0.0
        %1148 = vmatpush1.msra.mxu0 0.0
        %1149 = vmatprep.subr.mxu0 0.0
        %1150 = vmatpush1.msra.mxu0 0.0
        %1151 = vmatprep.subr.mxu0 0.0
        %1152 = vmatpush1.msra.mxu0 0.0
        %1153 = vmatprep.subr.mxu0 0.0
        %1154 = vmatpush1.msra.mxu0 0.0
        %1155 = vmatprep.subr.mxu0 0.0
        %1156 = vmatpush1.msra.mxu0 0.0
        %1157 = vmatprep.subr.mxu0 0.0
        %1158 = vmatpush1.msra.mxu0 0.0
        %1159 = vmatprep.subr.mxu0 0.0
        %1160 = vmatpush1.msra.mxu0 0.0
        %1161 = vmatprep.subr.mxu0 0.0
        %1162 = vmatpush1.msra.mxu0 0.0
        %1163 = vmatprep.subr.mxu0 0.0
        %1164 = vmatpush1.msra.mxu0 0.0
        %1165 = vmatprep.subr.mxu0 0.0
        %1166 = vmatpush1.msra.mxu0 0.0
        %1167 = vmatprep.subr.mxu0 0.0
        %1168 = vmatpush1.msra.mxu0 0.0
        %1169 = vmatprep.subr.mxu0 0.0
        %1170 = vmatpush1.msra.mxu0 0.0
        %1171 = vmatprep.subr.mxu0 0.0
        %1172 = vmatpush1.msra.mxu0 0.0
        %1173 = vmatprep.mubr.f32.mxu0 0.0
        %1174 = vmatmul.mubr.f32.gmra.mrb[0].mxu0 %v1105
        %v1175 = vpop.f32.mrb[0].mxu0
        %v1176 = vadd.f32 %v1092, %v1175
        %v1177 = vpop.f32.mrb[0].mxu0
        %1178 = vdwg.mxu0
        %1179 = vst [vmem:[%s389] sm:$0xf] %v1176
        %s1180 = sand.u32 %s268, 1
        %s1181 = scalar_lea.sflag [#allocation5], %s1180
        %s1182 = sand.u32 %s268, 1
        %s1183 = smul.addr %s1182, 4
        %s1184 = scalar_lea.vmem [#allocation4], %s1183
        // Predicated region
        $region65: #{tpu_custom_call.1} parent=59 // pred_check
          %p1185 = pneg %p278
        $region66: #{tpu_custom_call.1} parent=59 // pred_check_branch
          %1187 = sbr.rel (%p1185) target = $region68
        $region67: #{tpu_custom_call.1} parent=59 // pred_region
          %s1189 = ssub.s32 64, 64
          %1190 = vsyncadd %s1181, %s1189
          %s1191 = smul.addr %s28, 2
          %s1192 = sadd.s32 %s29, %s1191
          %s1193 = smul.addr %s1192, 64
          %s1194 = scalar_lea.hbm %s10, %s1193
          %s1196 = sshll.u32 %s1184, 4
          %s1197 = int_to_ptr.vmem [resolvable:$true] %s1196
          %1199 = dma.vmem_to_hbm [thread:$0]  %s1197, 64, %s1194, %s1181
        $region68: #{tpu_custom_call.1} parent=59 // pred_fallthru
          _
      $region60: #{tpu_custom_call.1} parent=5 // pred_fallthru
        _
      %p1200 = scmp.le.s32.totalorder 2, %s19
      // Predicated region
      $region69: #{tpu_custom_call.1} parent=5 // pred_check
        %p1201 = pneg %p1200
      $region70: #{tpu_custom_call.1} parent=5 // pred_check_branch
        %1203 = sbr.rel (%p1201) target = $region72
      $region71: #{tpu_custom_call.1} parent=5 // pred_region
        %s1204 = ssub.s32 %s19, 2
        // Predicated region
        $region73: #{tpu_custom_call.1} parent=71 // pred_check
          %p1205 = pneg %p284
        $region74: #{tpu_custom_call.1} parent=71 // pred_check_branch
          %1207 = sbr.rel (%p1205) target = $region76
        $region75: #{tpu_custom_call.1} parent=71 // pred_region
          %s1208 = sand.u32 %s269, 1
          %s1209 = scalar_lea.sflag [#allocation5], %s1208
          %s1210 = sand.u32 %s269, 1
          %s1211 = smul.addr %s1210, 4
          %s1212 = scalar_lea.vmem [#allocation4], %s1211
          %1213 = dma.done %s1209, 64
        $region76: #{tpu_custom_call.1} parent=71 // pred_fallthru
          _
      $region72: #{tpu_custom_call.1} parent=5 // pred_fallthru
        _
    $region6: #{tpu_custom_call.1} parent=1 // loop_footer
      %s23 = sadd.s32 1, %s19
    $region7: #{tpu_custom_call.1} parent=1 // loop_footer_branch
      %18 = sbr.rel target = $region3
    $region8: #{tpu_custom_call.1} parent=1 // loop_exit
      _
    %1214 = vsyncpa [#allocation5], 1
    %s1215 = scalar_lea.sflag [#allocation5], 1
    %1216 = vsyncpa %s1215, 1

// kernel: tpu_custom_call.1
$region0: #{tpu_custom_call.1}
  #allocation0 [shape = 'u32[]', space=smem, size = 0x4, offset = 0x4, fixed_abs, tag = 'smem constant byte address 0x4 - core index']
  #allocation1 [shape = 'u32[144,128]{1,0:T(1,128)}', space=vmem, size = 0x12000, scoped, tag = 'internal scratch']
  #allocation2 [shape = 'f32[4,8]{1,0:T(4,128)}', space=vmem, size = 0x800, scoped, tag = 'scratch operand']
  #allocation3 [shape = 'f32[4,8]{1,0:T(4,128)}', space=vmem, size = 0x800, scoped, tag = 'scratch operand']
  %s0 = inlined_call_operand.vmem [shape: f32[2,4,256], index: 0, kind: input, shape index: {}]
  %s1 = inlined_call_operand.vmem [shape: f32[2,32,8], index: 1, kind: input, shape index: {}]
  %s2 = inlined_call_operand.vmem [shape: f32[4,4], index: 2, kind: input, shape index: {}]
  %s3 = inlined_call_operand.vmem [shape: f32[4,1], index: 3, kind: input, shape index: {}]
  %s4 = inlined_call_operand.vmem [shape: f32[4,32], index: 4, kind: input, shape index: {}]
  %s5 = inlined_call_operand.vmem [shape: f32[4,1], index: 5, kind: input, shape index: {}]
  %s6 = inlined_call_operand.vmem [shape: f32[4,32], index: 6, kind: input, shape index: {}]
  %s7 = inlined_call_operand.vmem [shape: f32[4,1], index: 7, kind: input, shape index: {}]
  %s8 = inlined_call_operand.vmem [shape: f32[4,4], index: 8, kind: input, shape index: {}]
  %s9 = inlined_call_operand.vmem [shape: f32[4,1], index: 9, kind: input, shape index: {}]
  %s10 = inlined_call_operand.hbm [shape: f32[2,4,256], index: 10, kind: output, shape index: {}]
  %s11 = sld [smem:[#allocation0]]
  $region77: #{tpu_custom_call.1} parent=0
    _
  %s13 = ssub.s32 1, %s11
  %s14 = scalar_select 0, %s13, %s11
  $region1: #{tpu_custom_call.1} parent=0
    #allocation4 [shape = 'u8[4096]{0}', space=vmem, size = 0x1000, scoped, tag = 'output window, operand 0']
    #allocation5 [shape = 's32[2]{0}', space=sflag, size = 0x8, scoped, tag = 'scoped memory for tpu_custom_call.1']
    %15 = vsyncpa [#allocation5], 0
    %s16 = scalar_lea.sflag [#allocation5], 1
    %17 = vsyncpa %s16, 0
    loop: start=0, step=1, limit=6
    $region2: #{tpu_custom_call.1} parent=1 // loop_pre_header
      _
    $region3: #{tpu_custom_call.1} parent=1 // loop_header
      %s19 = sphi 0, %s23
      %p20 = scmp.ge.s32.totalorder %s19, 6
      %s26 = sphi 0, %s38
      %s27 = sphi 0, %s34
      %s28 = sphi 0, %s26
      %s29 = sphi 0, %s27
      %s30 = sphi 0, %s28
      %s31 = sphi 0, %s29
      %s43 = sphi 0, %s45
      %s46 = sphi 0, %s43
      %s47 = sphi 0, %s46
      %s63 = sphi 0, %s47
      %s69 = sphi 0, %s71
      %s72 = sphi 0, %s69
      %s73 = sphi 0, %s72
      %s89 = sphi 0, %s73
      %s93 = sphi 0, %s93
      %s95 = sphi 0, %s93
      %s96 = sphi 0, %s95
      %s110 = sphi 0, %s96
      %s114 = sphi 0, %s114
      %s116 = sphi 0, %s114
      %s117 = sphi 0, %s116
      %s131 = sphi 0, %s117
      %s135 = sphi 0, %s135
      %s137 = sphi 0, %s135
      %s138 = sphi 0, %s137
      %s152 = sphi 0, %s138
      %s156 = sphi 0, %s156
      %s158 = sphi 0, %s156
      %s159 = sphi 0, %s158
      %s173 = sphi 0, %s159
      %s177 = sphi 0, %s177
      %s179 = sphi 0, %s177
      %s180 = sphi 0, %s179
      %s194 = sphi 0, %s180
      %s198 = sphi 0, %s198
      %s200 = sphi 0, %s198
      %s201 = sphi 0, %s200
      %s215 = sphi 0, %s201
      %s219 = sphi 0, %s219
      %s221 = sphi 0, %s219
      %s222 = sphi 0, %s221
      %s236 = sphi 0, %s222
      %s240 = sphi 0, %s240
      %s242 = sphi 0, %s240
      %s243 = sphi 0, %s242
      %s257 = sphi 0, %s243
      %s265 = sphi 0, %s267
      %s268 = sphi 0, %s265
      %s269 = sphi 0, %s268
      %s285 = sphi 0, %s269
    $region4: #{tpu_custom_call.1} parent=1 // loop_header_branch
      %22 = sbr.rel (%p20) target = $region8
    $region5: #{tpu_custom_call.1} parent=1 // loop_body
      %s24 = ssub.s32 %s19, 1
      %s25 = ssub.s32 %s19, 2
      %s32 = sadd.s32 1, %s27
      %p33 = scmp.ge.s32.totalorder %s32, 2
      %s34 = scalar_select %p33, 0, %s32
      %s35 = sadd.s32 1, %s26
      %s36 = scalar_select %p33, %s35, %s26
      %p37 = scmp.ge.s32.totalorder %s36, 2
      %s38 = scalar_select %p37, 0, %s36
      %s39 = ssub.s32 %s26, %s38
      %s40 = ssub.s32 %s27, %s34
      %s41 = sor.u32 %s39, %s40
      %p42 = scmp.eq.s32.totalorder %s41, 0
      %s44 = sadd.s32 %s43, 1
      %s45 = scalar_select %p42, %s43, %s44
      %p48 = pneg %p42
      %p49 = scmp.eq.s32.totalorder %s19, 3
      %p50 = por %p48, %p49
      %p51 = scmp.ne.s32.totalorder %s43, %s46
      %p52 = scmp.eq.s32.totalorder %s19, 0
      %p53 = por %p51, %p52
      %p54 = scmp.ne.s32.totalorder %s43, %s46
      %p55 = scmp.eq.s32.totalorder %s24, 3
      %p56 = por %p54, %p55
      %p57 = scmp.ne.s32.totalorder %s46, %s47
      %p58 = scmp.eq.s32.totalorder %s24, 0
      %p59 = por %p57, %p58
      %p60 = scmp.ne.s32.totalorder %s46, %s47
      %p61 = scmp.eq.s32.totalorder %s25, 3
      %p62 = por %p60, %p61
      %p64 = scmp.ne.s32.totalorder %s47, %s63
      %p65 = scmp.eq.s32.totalorder %s25, 0
      %p66 = por %p64, %p65
      %s67 = ssub.s32 %s26, %s38
      %p68 = scmp.eq.s32.totalorder %s67, 0
      %s70 = sadd.s32 %s69, 1
      %s71 = scalar_select %p68, %s69, %s70
      %p74 = pneg %p68
      %p75 = scmp.eq.s32.totalorder %s19, 3
      %p76 = por %p74, %p75
      %p77 = scmp.ne.s32.totalorder %s69, %s72
      %p78 = scmp.eq.s32.totalorder %s19, 0
      %p79 = por %p77, %p78
      %p80 = scmp.ne.s32.totalorder %s69, %s72
      %p81 = scmp.eq.s32.totalorder %s24, 3
      %p82 = por %p80, %p81
      %p83 = scmp.ne.s32.totalorder %s72, %s73
      %p84 = scmp.eq.s32.totalorder %s24, 0
      %p85 = por %p83, %p84
      %p86 = scmp.ne.s32.totalorder %s72, %s73
      %p87 = scmp.eq.s32.totalorder %s25, 3
      %p88 = por %p86, %p87
      %p90 = scmp.ne.s32.totalorder %s73, %s89
      %p91 = scmp.eq.s32.totalorder %s25, 0
      %p92 = por %p90, %p91
      %s94 = sadd.s32 %s93, 1
      %p97 = scmp.eq.s32.totalorder %s19, 3
      %p98 = scmp.ne.s32.totalorder %s93, %s95
      %p99 = scmp.eq.s32.totalorder %s19, 0
      %p100 = por %p98, %p99
      %p101 = scmp.ne.s32.totalorder %s93, %s95
      %p102 = scmp.eq.s32.totalorder %s24, 3
      %p103 = por %p101, %p102
      %p104 = scmp.ne.s32.totalorder %s95, %s96
      %p105 = scmp.eq.s32.totalorder %s24, 0
      %p106 = por %p104, %p105
      %p107 = scmp.ne.s32.totalorder %s95, %s96
      %p108 = scmp.eq.s32.totalorder %s25, 3
      %p109 = por %p107, %p108
      %p111 = scmp.ne.s32.totalorder %s96, %s110
      %p112 = scmp.eq.s32.totalorder %s25, 0
      %p113 = por %p111, %p112
      %s115 = sadd.s32 %s114, 1
      %p118 = scmp.eq.s32.totalorder %s19, 3
      %p119 = scmp.ne.s32.totalorder %s114, %s116
      %p120 = scmp.eq.s32.totalorder %s19, 0
      %p121 = por %p119, %p120
      %p122 = scmp.ne.s32.totalorder %s114, %s116
      %p123 = scmp.eq.s32.totalorder %s24, 3
      %p124 = por %p122, %p123
      %p125 = scmp.ne.s32.totalorder %s116, %s117
      %p126 = scmp.eq.s32.totalorder %s24, 0
      %p127 = por %p125, %p126
      %p128 = scmp.ne.s32.totalorder %s116, %s117
      %p129 = scmp.eq.s32.totalorder %s25, 3
      %p130 = por %p128, %p129
      %p132 = scmp.ne.s32.totalorder %s117, %s131
      %p133 = scmp.eq.s32.totalorder %s25, 0
      %p134 = por %p132, %p133
      %s136 = sadd.s32 %s135, 1
      %p139 = scmp.eq.s32.totalorder %s19, 3
      %p140 = scmp.ne.s32.totalorder %s135, %s137
      %p141 = scmp.eq.s32.totalorder %s19, 0
      %p142 = por %p140, %p141
      %p143 = scmp.ne.s32.totalorder %s135, %s137
      %p144 = scmp.eq.s32.totalorder %s24, 3
      %p145 = por %p143, %p144
      %p146 = scmp.ne.s32.totalorder %s137, %s138
      %p147 = scmp.eq.s32.totalorder %s24, 0
      %p148 = por %p146, %p147
      %p149 = scmp.ne.s32.totalorder %s137, %s138
      %p150 = scmp.eq.s32.totalorder %s25, 3
      %p151 = por %p149, %p150
      %p153 = scmp.ne.s32.totalorder %s138, %s152
      %p154 = scmp.eq.s32.totalorder %s25, 0
      %p155 = por %p153, %p154
      %s157 = sadd.s32 %s156, 1
      %p160 = scmp.eq.s32.totalorder %s19, 3
      %p161 = scmp.ne.s32.totalorder %s156, %s158
      %p162 = scmp.eq.s32.totalorder %s19, 0
      %p163 = por %p161, %p162
      %p164 = scmp.ne.s32.totalorder %s156, %s158
      %p165 = scmp.eq.s32.totalorder %s24, 3
      %p166 = por %p164, %p165
      %p167 = scmp.ne.s32.totalorder %s158, %s159
      %p168 = scmp.eq.s32.totalorder %s24, 0
      %p169 = por %p167, %p168
      %p170 = scmp.ne.s32.totalorder %s158, %s159
      %p171 = scmp.eq.s32.totalorder %s25, 3
      %p172 = por %p170, %p171
      %p174 = scmp.ne.s32.totalorder %s159, %s173
      %p175 = scmp.eq.s32.totalorder %s25, 0
      %p176 = por %p174, %p175
      %s178 = sadd.s32 %s177, 1
      %p181 = scmp.eq.s32.totalorder %s19, 3
      %p182 = scmp.ne.s32.totalorder %s177, %s179
      %p183 = scmp.eq.s32.totalorder %s19, 0
      %p184 = por %p182, %p183
      %p185 = scmp.ne.s32.totalorder %s177, %s179
      %p186 = scmp.eq.s32.totalorder %s24, 3
      %p187 = por %p185, %p186
      %p188 = scmp.ne.s32.totalorder %s179, %s180
      %p189 = scmp.eq.s32.totalorder %s24, 0
      %p190 = por %p188, %p189
      %p191 = scmp.ne.s32.totalorder %s179, %s180
      %p192 = scmp.eq.s32.totalorder %s25, 3
      %p193 = por %p191, %p192
      %p195 = scmp.ne.s32.totalorder %s180, %s194
      %p196 = scmp.eq.s32.totalorder %s25, 0
      %p197 = por %p195, %p196
      %s199 = sadd.s32 %s198, 1
      %p202 = scmp.eq.s32.totalorder %s19, 3
      %p203 = scmp.ne.s32.totalorder %s198, %s200
      %p204 = scmp.eq.s32.totalorder %s19, 0
      %p205 = por %p203, %p204
      %p206 = scmp.ne.s32.totalorder %s198, %s200
      %p207 = scmp.eq.s32.totalorder %s24, 3
      %p208 = por %p206, %p207
      %p209 = scmp.ne.s32.totalorder %s200, %s201
      %p210 = scmp.eq.s32.totalorder %s24, 0
      %p211 = por %p209, %p210
      %p212 = scmp.ne.s32.totalorder %s200, %s201
      %p213 = scmp.eq.s32.totalorder %s25, 3
      %p214 = por %p212, %p213
      %p216 = scmp.ne.s32.totalorder %s201, %s215
      %p217 = scmp.eq.s32.totalorder %s25, 0
      %p218 = por %p216, %p217
      %s220 = sadd.s32 %s219, 1
      %p223 = scmp.eq.s32.totalorder %s19, 3
      %p224 = scmp.ne.s32.totalorder %s219, %s221
      %p225 = scmp.eq.s32.totalorder %s19, 0
      %p226 = por %p224, %p225
      %p227 = scmp.ne.s32.totalorder %s219, %s221
      %p228 = scmp.eq.s32.totalorder %s24, 3
      %p229 = por %p227, %p228
      %p230 = scmp.ne.s32.totalorder %s221, %s222
      %p231 = scmp.eq.s32.totalorder %s24, 0
      %p232 = por %p230, %p231
      %p233 = scmp.ne.s32.totalorder %s221, %s222
      %p234 = scmp.eq.s32.totalorder %s25, 3
      %p235 = por %p233, %p234
      %p237 = scmp.ne.s32.totalorder %s222, %s236
      %p238 = scmp.eq.s32.totalorder %s25, 0
      %p239 = por %p237, %p238
      %s241 = sadd.s32 %s240, 1
      %p244 = scmp.eq.s32.totalorder %s19, 3
      %p245 = scmp.ne.s32.totalorder %s240, %s242
      %p246 = scmp.eq.s32.totalorder %s19, 0
      %p247 = por %p245, %p246
      %p248 = scmp.ne.s32.totalorder %s240, %s242
      %p249 = scmp.eq.s32.totalorder %s24, 3
      %p250 = por %p248, %p249
      %p251 = scmp.ne.s32.totalorder %s242, %s243
      %p252 = scmp.eq.s32.totalorder %s24, 0
      %p253 = por %p251, %p252
      %p254 = scmp.ne.s32.totalorder %s242, %s243
      %p255 = scmp.eq.s32.totalorder %s25, 3
      %p256 = por %p254, %p255
      %p258 = scmp.ne.s32.totalorder %s243, %s257
      %p259 = scmp.eq.s32.totalorder %s25, 0
      %p260 = por %p258, %p259
      %s261 = ssub.s32 %s26, %s38
      %s262 = ssub.s32 %s27, %s34
      %s263 = sor.u32 %s261, %s262
      %p264 = scmp.eq.s32.totalorder %s263, 0
      %s266 = sadd.s32 %s265, 1
      %s267 = scalar_select %p264, %s265, %s266
      %p270 = pneg %p264
      %p271 = scmp.eq.s32.totalorder %s19, 3
      %p272 = por %p270, %p271
      %p273 = scmp.ne.s32.totalorder %s265, %s268
      %p274 = scmp.eq.s32.totalorder %s19, 0
      %p275 = por %p273, %p274
      %p276 = scmp.ne.s32.totalorder %s265, %s268
      %p277 = scmp.eq.s32.totalorder %s24, 3
      %p278 = por %p276, %p277
      %p279 = scmp.ne.s32.totalorder %s268, %s269
      %p280 = scmp.eq.s32.totalorder %s24, 0
      %p281 = por %p279, %p280
      %p282 = scmp.ne.s32.totalorder %s268, %s269
      %p283 = scmp.eq.s32.totalorder %s25, 3
      %p284 = por %p282, %p283
      %p286 = scmp.ne.s32.totalorder %s269, %s285
      %p287 = scmp.eq.s32.totalorder %s25, 0
      %p288 = por %p286, %p287
      %p289 = scmp.le.s32.totalorder 1, %s19
      %p290 = scmp.lt.s32.totalorder %s19, 5
      %p291 = pnand %p289, %p290
      %p292 = pneg %p291
      // Predicated region
      $region9: #{tpu_custom_call.1} parent=5 // pred_check
        _
      $region10: #{tpu_custom_call.1} parent=5 // pred_check_branch
        %294 = sbr.rel (%p291) target = $region12
      $region11: #{tpu_custom_call.1} parent=5 // pred_region
        %s295 = ssub.s32 %s19, 1
        // Predicated region
        $region13: #{tpu_custom_call.1} parent=11 // pred_check
          %p296 = pneg %p106
        $region14: #{tpu_custom_call.1} parent=11 // pred_check_branch
          %298 = sbr.rel (%p296) target = $region16
        $region15: #{tpu_custom_call.1} parent=11 // pred_region
          _
        $region16: #{tpu_custom_call.1} parent=11 // pred_fallthru
          _
        // Predicated region
        $region17: #{tpu_custom_call.1} parent=11 // pred_check
          %p299 = pneg %p127
        $region18: #{tpu_custom_call.1} parent=11 // pred_check_branch
          %301 = sbr.rel (%p299) target = $region20
        $region19: #{tpu_custom_call.1} parent=11 // pred_region
          _
        $region20: #{tpu_custom_call.1} parent=11 // pred_fallthru
          _
        // Predicated region
        $region21: #{tpu_custom_call.1} parent=11 // pred_check
          %p302 = pneg %p148
        $region22: #{tpu_custom_call.1} parent=11 // pred_check_branch
          %304 = sbr.rel (%p302) target = $region24
        $region23: #{tpu_custom_call.1} parent=11 // pred_region
          _
        $region24: #{tpu_custom_call.1} parent=11 // pred_fallthru
          _
        // Predicated region
        $region25: #{tpu_custom_call.1} parent=11 // pred_check
          %p305 = pneg %p169
        $region26: #{tpu_custom_call.1} parent=11 // pred_check_branch
          %307 = sbr.rel (%p305) target = $region28
        $region27: #{tpu_custom_call.1} parent=11 // pred_region
          _
        $region28: #{tpu_custom_call.1} parent=11 // pred_fallthru
          _
        // Predicated region
        $region29: #{tpu_custom_call.1} parent=11 // pred_check
          %p308 = pneg %p190
        $region30: #{tpu_custom_call.1} parent=11 // pred_check_branch
          %310 = sbr.rel (%p308) target = $region32
        $region31: #{tpu_custom_call.1} parent=11 // pred_region
          _
        $region32: #{tpu_custom_call.1} parent=11 // pred_fallthru
          _
        // Predicated region
        $region33: #{tpu_custom_call.1} parent=11 // pred_check
          %p311 = pneg %p211
        $region34: #{tpu_custom_call.1} parent=11 // pred_check_branch
          %313 = sbr.rel (%p311) target = $region36
        $region35: #{tpu_custom_call.1} parent=11 // pred_region
          _
        $region36: #{tpu_custom_call.1} parent=11 // pred_fallthru
          _
        // Predicated region
        $region37: #{tpu_custom_call.1} parent=11 // pred_check
          %p314 = pneg %p232
        $region38: #{tpu_custom_call.1} parent=11 // pred_check_branch
          %316 = sbr.rel (%p314) target = $region40
        $region39: #{tpu_custom_call.1} parent=11 // pred_region
          _
        $region40: #{tpu_custom_call.1} parent=11 // pred_fallthru
          _
        // Predicated region
        $region41: #{tpu_custom_call.1} parent=11 // pred_check
          %p317 = pneg %p253
        $region42: #{tpu_custom_call.1} parent=11 // pred_check_branch
          %319 = sbr.rel (%p317) target = $region44
        $region43: #{tpu_custom_call.1} parent=11 // pred_region
          _
        $region44: #{tpu_custom_call.1} parent=11 // pred_fallthru
          _
      $region12: #{tpu_custom_call.1} parent=5 // pred_fallthru
        _
      %p320 = scmp.lt.s32.totalorder %s19, 4
      // Predicated region
      $region45: #{tpu_custom_call.1} parent=5 // pred_check
        %p321 = pneg %p320
      $region46: #{tpu_custom_call.1} parent=5 // pred_check_branch
        %323 = sbr.rel (%p321) target = $region48
      $region47: #{tpu_custom_call.1} parent=5 // pred_region
        // Predicated region
        $region49: #{tpu_custom_call.1} parent=47 // pred_check
          %p324 = pneg %p53
        $region50: #{tpu_custom_call.1} parent=47 // pred_check_branch
          %326 = sbr.rel (%p324) target = $region52
        $region51: #{tpu_custom_call.1} parent=47 // pred_region
          %p327 = scmp.lt.s32.totalorder %s26, 1
          %s328 = scalar_select %p327, %s26, 1
          %p329 = scmp.lt.s32.totalorder %s27, 1
          %s330 = scalar_select %p329, %s27, 1
          %s331 = smul.addr %s328, 2
          %s332 = sadd.s32 %s330, %s331
          %s333 = smul.addr %s332, 4
          %s334 = scalar_lea.vmem %s0, %s333
        $region52: #{tpu_custom_call.1} parent=47 // pred_fallthru
          _
        // Predicated region
        $region53: #{tpu_custom_call.1} parent=47 // pred_check
          %p335 = pneg %p79
        $region54: #{tpu_custom_call.1} parent=47 // pred_check_branch
          %337 = sbr.rel (%p335) target = $region56
        $region55: #{tpu_custom_call.1} parent=47 // pred_region
          %p338 = scmp.lt.s32.totalorder %s26, 1
          %s339 = scalar_select %p338, %s26, 1
          %s340 = smul.addr %s339, 4
          %s341 = smul.addr %s340, 8
          %s342 = scalar_lea.vmem %s1, %s341
        $region56: #{tpu_custom_call.1} parent=47 // pred_fallthru
          _
      $region48: #{tpu_custom_call.1} parent=5 // pred_fallthru
        _
      %p343 = scmp.le.s32.totalorder 1, %s19
      %p344 = scmp.lt.s32.totalorder %s19, 5
      %p345 = pnand %p343, %p344
      %p346 = pneg %p345
      // Predicated region
      $region57: #{tpu_custom_call.1} parent=5 // pred_check
        _
      $region58: #{tpu_custom_call.1} parent=5 // pred_check_branch
        %348 = sbr.rel (%p345) target = $region60
      $region59: #{tpu_custom_call.1} parent=5 // pred_region
        %s349 = ssub.s32 %s19, 1
        %p350 = scmp.lt.s32.totalorder %s28, 1
        %s351 = scalar_select %p350, %s28, 1
        %p352 = scmp.lt.s32.totalorder %s29, 1
        %s353 = scalar_select %p352, %s29, 1
        %s354 = smul.addr %s351, 2
        %s355 = sadd.s32 %s353, %s354
        %s356 = smul.addr %s355, 4
        %s357 = scalar_lea.vmem %s0, %s356
        %p358 = pneg %p59
        %p359 = pneg %p56
        %p360 = scmp.lt.s32.totalorder %s28, 1
        %s361 = scalar_select %p360, %s28, 1
        %s362 = smul.addr %s361, 4
        %s363 = smul.addr %s362, 8
        %s364 = scalar_lea.vmem %s1, %s363
        %p365 = pneg %p85
        %p366 = pneg %p82
        %p367 = pneg %p106
        %p368 = pneg %p103
        %p369 = pneg %p127
        %p370 = pneg %p124
        %p371 = pneg %p148
        %p372 = pneg %p145
        %p373 = pneg %p169
        %p374 = pneg %p166
        %p375 = pneg %p190
        %p376 = pneg %p187
        %p377 = pneg %p211
        %p378 = pneg %p208
        %p379 = pneg %p232
        %p380 = pneg %p229
        %p381 = pneg %p253
        %p382 = pneg %p250
        %p383 = pneg %p281
        %p384 = pneg %p278
        %s385 = sand.u32 %s268, 1
        %s386 = scalar_lea.sflag [#allocation5], %s385
        %s387 = sand.u32 %s268, 1
        %s388 = smul.addr %s387, 4
        %s389 = scalar_lea.vmem [#allocation4], %s388
        %p390 = scmp.lt.s32.totalorder %s28, 1
        %s391 = scalar_select %p390, %s28, 1
        %p392 = scmp.lt.s32.totalorder %s29, 1
        %s393 = scalar_select %p392, %s29, 1
        %s394 = smul.addr %s391, 2
        %s395 = sadd.s32 %s393, %s394
        %s396 = smul.addr %s395, 4
        %s397 = scalar_lea.vmem %s0, %s396
        %p398 = scmp.lt.s32.totalorder %s28, 1
        %s399 = scalar_select %p398, %s28, 1
        %s400 = smul.addr %s399, 4
        %s401 = smul.addr %s400, 8
        %s402 = scalar_lea.vmem %s1, %s401
        %p403 = scmp.eq.s32.totalorder %s29, 0
        // Predicated region
        $region61: #{tpu_custom_call.1} parent=59 // pred_check
          %p404 = pneg %p403
        $region62: #{tpu_custom_call.1} parent=59 // pred_check_branch
          %406 = sbr.rel (%p404) target = $region64
        $region63: #{tpu_custom_call.1} parent=59 // pred_region
          %v407 = vld [vmem:[%s402] sm:$0xff]
          %v408 = vld [vmem:[%s402 + $0x8] sm:$0xff]
          %v409 = vld [vmem:[%s402 + $0x10] sm:$0xff]
          %v410 = vld [vmem:[%s402 + $0x18] sm:$0xff]
          %v411 = vld [vmem:[%s4] sm:$0xf]
          %v412 = vld [vmem:[%s5] sm:$0xf]
          %414 = vset.pattern.permute.xlu0 0
          %415 = vperm.xlu0 %414, %v412
          %v416 = vpop.permute.xlu0 %415
          %vm418 = vcmask 261120
          %v420 = vsel %vm418, %v411, 0
          %422 = vmatprep.subr.mxu0 0.0
          %423 = vmatpush1.msra.mxu0 %v407
          %424 = vmatprep.subr.mxu0 0.0
          %425 = vmatpush1.msra.mxu0 %v408
          %426 = vmatprep.subr.mxu0 0.0
          %427 = vmatpush1.msra.mxu0 %v409
          %428 = vmatprep.subr.mxu0 0.0
          %429 = vmatpush1.msra.mxu0 %v410
          %430 = vmatprep.subr.mxu0 0.0
          %431 = vmatpush1.msra.mxu0 0.0
          %432 = vmatprep.subr.mxu0 0.0
          %433 = vmatpush1.msra.mxu0 0.0
          %434 = vmatprep.subr.mxu0 0.0
          %435 = vmatpush1.msra.mxu0 0.0
          %436 = vmatprep.subr.mxu0 0.0
          %437 = vmatpush1.msra.mxu0 0.0
          %438 = vmatprep.subr.mxu0 0.0
          %439 = vmatpush1.msra.mxu0 0.0
          %440 = vmatprep.subr.mxu0 0.0
          %441 = vmatpush1.msra.mxu0 0.0
          %442 = vmatprep.subr.mxu0 0.0
          %443 = vmatpush1.msra.mxu0 0.0
          %444 = vmatprep.subr.mxu0 0.0
          %445 = vmatpush1.msra.mxu0 0.0
          %446 = vmatprep.subr.mxu0 0.0
          %447 = vmatpush1.msra.mxu0 0.0
          %448 = vmatprep.subr.mxu0 0.0
          %449 = vmatpush1.msra.mxu0 0.0
          %450 = vmatprep.subr.mxu0 0.0
          %451 = vmatpush1.msra.mxu0 0.0
          %452 = vmatprep.subr.mxu0 0.0
          %453 = vmatpush1.msra.mxu0 0.0
          %454 = vmatprep.subr.mxu0 0.0
          %455 = vmatpush1.msra.mxu0 0.0
          %456 = vmatprep.subr.mxu0 0.0
          %457 = vmatpush1.msra.mxu0 0.0
          %458 = vmatprep.subr.mxu0 0.0
          %459 = vmatpush1.msra.mxu0 0.0
          %460 = vmatprep.subr.mxu0 0.0
          %461 = vmatpush1.msra.mxu0 0.0
          %462 = vmatprep.subr.mxu0 0.0
          %463 = vmatpush1.msra.mxu0 0.0
          %464 = vmatprep.subr.mxu0 0.0
          %465 = vmatpush1.msra.mxu0 0.0
          %466 = vmatprep.subr.mxu0 0.0
          %467 = vmatpush1.msra.mxu0 0.0
          %468 = vmatprep.subr.mxu0 0.0
          %469 = vmatpush1.msra.mxu0 0.0
          %470 = vmatprep.subr.mxu0 0.0
          %471 = vmatpush1.msra.mxu0 0.0
          %472 = vmatprep.subr.mxu0 0.0
          %473 = vmatpush1.msra.mxu0 0.0
          %474 = vmatprep.subr.mxu0 0.0
          %475 = vmatpush1.msra.mxu0 0.0
          %476 = vmatprep.subr.mxu0 0.0
          %477 = vmatpush1.msra.mxu0 0.0
          %478 = vmatprep.subr.mxu0 0.0
          %479 = vmatpush1.msra.mxu0 0.0
          %480 = vmatprep.subr.mxu0 0.0
          %481 = vmatpush1.msra.mxu0 0.0
          %482 = vmatprep.subr.mxu0 0.0
          %483 = vmatpush1.msra.mxu0 0.0
          %484 = vmatprep.subr.mxu0 0.0
          %485 = vmatpush1.msra.mxu0 0.0
          %486 = vmatprep.mubr.f32.mxu0 0.0
          %487 = vmatmul.mubr.f32.gmra.mrb[0].mxu0 %v420
          %v488 = vpop.f32.mrb[0].mxu0
          %v489 = vadd.f32 %v416, %v488
          %v490 = vpop.f32.mrb[0].mxu0
          %491 = vdwg.mxu0
          %v492 = vld [vmem:[%s6] sm:$0xf]
          %v493 = vld [vmem:[%s7] sm:$0xf]
          %495 = vset.pattern.permute.xlu0 0
          %496 = vperm.xlu0 %495, %v493
          %v497 = vpop.permute.xlu0 %496
          %v500 = vsel %vm418, %v492, 0
          %502 = vmatprep.subr.mxu0 0.0
          %503 = vmatpush1.msra.mxu0 %v407
          %504 = vmatprep.subr.mxu0 0.0
          %505 = vmatpush1.msra.mxu0 %v408
          %506 = vmatprep.subr.mxu0 0.0
          %507 = vmatpush1.msra.mxu0 %v409
          %508 = vmatprep.subr.mxu0 0.0
          %509 = vmatpush1.msra.mxu0 %v410
          %510 = vmatprep.subr.mxu0 0.0
          %511 = vmatpush1.msra.mxu0 0.0
          %512 = vmatprep.subr.mxu0 0.0
          %513 = vmatpush1.msra.mxu0 0.0
          %514 = vmatprep.subr.mxu0 0.0
          %515 = vmatpush1.msra.mxu0 0.0
          %516 = vmatprep.subr.mxu0 0.0
          %517 = vmatpush1.msra.mxu0 0.0
          %518 = vmatprep.subr.mxu0 0.0
          %519 = vmatpush1.msra.mxu0 0.0
          %520 = vmatprep.subr.mxu0 0.0
          %521 = vmatpush1.msra.mxu0 0.0
          %522 = vmatprep.subr.mxu0 0.0
          %523 = vmatpush1.msra.mxu0 0.0
          %524 = vmatprep.subr.mxu0 0.0
          %525 = vmatpush1.msra.mxu0 0.0
          %526 = vmatprep.subr.mxu0 0.0
          %527 = vmatpush1.msra.mxu0 0.0
          %528 = vmatprep.subr.mxu0 0.0
          %529 = vmatpush1.msra.mxu0 0.0
          %530 = vmatprep.subr.mxu0 0.0
          %531 = vmatpush1.msra.mxu0 0.0
          %532 = vmatprep.subr.mxu0 0.0
          %533 = vmatpush1.msra.mxu0 0.0
          %534 = vmatprep.subr.mxu0 0.0
          %535 = vmatpush1.msra.mxu0 0.0
          %536 = vmatprep.subr.mxu0 0.0
          %537 = vmatpush1.msra.mxu0 0.0
          %538 = vmatprep.subr.mxu0 0.0
          %539 = vmatpush1.msra.mxu0 0.0
          %540 = vmatprep.subr.mxu0 0.0
          %541 = vmatpush1.msra.mxu0 0.0
          %542 = vmatprep.subr.mxu0 0.0
          %543 = vmatpush1.msra.mxu0 0.0
          %544 = vmatprep.subr.mxu0 0.0
          %545 = vmatpush1.msra.mxu0 0.0
          %546 = vmatprep.subr.mxu0 0.0
          %547 = vmatpush1.msra.mxu0 0.0
          %548 = vmatprep.subr.mxu0 0.0
          %549 = vmatpush1.msra.mxu0 0.0
          %550 = vmatprep.subr.mxu0 0.0
          %551 = vmatpush1.msra.mxu0 0.0
          %552 = vmatprep.subr.mxu0 0.0
          %553 = vmatpush1.msra.mxu0 0.0
          %554 = vmatprep.subr.mxu0 0.0
          %555 = vmatpush1.msra.mxu0 0.0
          %556 = vmatprep.subr.mxu0 0.0
          %557 = vmatpush1.msra.mxu0 0.0
          %558 = vmatprep.subr.mxu0 0.0
          %559 = vmatpush1.msra.mxu0 0.0
          %560 = vmatprep.subr.mxu0 0.0
          %561 = vmatpush1.msra.mxu0 0.0
          %562 = vmatprep.subr.mxu0 0.0
          %563 = vmatpush1.msra.mxu0 0.0
          %564 = vmatprep.subr.mxu0 0.0
          %565 = vmatpush1.msra.mxu0 0.0
          %566 = vmatprep.mubr.f32.mxu0 0.0
          %567 = vmatmul.mubr.f32.gmra.mrb[0].mxu0 %v500
          %v568 = vpop.f32.mrb[0].mxu0
          %v569 = vadd.f32 %v497, %v568
          %v570 = vpop.f32.mrb[0].mxu0
          %571 = vdwg.mxu0
          %vm572 = vcmask 60416
          %573 = vst.msk [vmem:[#allocation2] sm:$0xf] %vm572, %v489
          %574 = vst.msk [vmem:[#allocation3] sm:$0xf] %vm572, %v569
        $region64: #{tpu_custom_call.1} parent=59 // pred_fallthru
          _
        %v575 = vld [vmem:[%s397] sm:$0xf]
        %v576 = vld [vmem:[%s2] sm:$0xf]
        %v577 = vld [vmem:[%s3] sm:$0xf]
        %579 = vset.pattern.permute.xlu0 0
        %580 = vperm.xlu0 %579, %v577
        %v581 = vpop.permute.xlu0 %580
        %vm583 = vcmask 31744
        %v585 = vsel %vm583, %v576, 0
        %vm587 = vcmask 1043456
        %v589 = vsel %vm587, %v575, 0
        %591 = vmatprep.subr.mxu0 0.0
        %592 = vmatpush1.msra.mxu0 %v589
        %593 = vmatprep.subr.mxu0 0.0
        %594 = vmatpush1.msra.mxu0 0.0
        %595 = vmatprep.subr.mxu0 0.0
        %596 = vmatpush1.msra.mxu0 0.0
        %597 = vmatprep.subr.mxu0 0.0
        %598 = vmatpush1.msra.mxu0 0.0
        %599 = vmatprep.subr.mxu0 0.0
        %600 = vmatpush1.msra.mxu0 0.0
        %601 = vmatprep.subr.mxu0 0.0
        %602 = vmatpush1.msra.mxu0 0.0
        %603 = vmatprep.subr.mxu0 0.0
        %604 = vmatpush1.msra.mxu0 0.0
        %605 = vmatprep.subr.mxu0 0.0
        %606 = vmatpush1.msra.mxu0 0.0
        %607 = vmatprep.subr.mxu0 0.0
        %608 = vmatpush1.msra.mxu0 0.0
        %609 = vmatprep.subr.mxu0 0.0
        %610 = vmatpush1.msra.mxu0 0.0
        %611 = vmatprep.subr.mxu0 0.0
        %612 = vmatpush1.msra.mxu0 0.0
        %613 = vmatprep.subr.mxu0 0.0
        %614 = vmatpush1.msra.mxu0 0.0
        %615 = vmatprep.subr.mxu0 0.0
        %616 = vmatpush1.msra.mxu0 0.0
        %617 = vmatprep.subr.mxu0 0.0
        %618 = vmatpush1.msra.mxu0 0.0
        %619 = vmatprep.subr.mxu0 0.0
        %620 = vmatpush1.msra.mxu0 0.0
        %621 = vmatprep.subr.mxu0 0.0
        %622 = vmatpush1.msra.mxu0 0.0
        %623 = vmatprep.subr.mxu0 0.0
        %624 = vmatpush1.msra.mxu0 0.0
        %625 = vmatprep.subr.mxu0 0.0
        %626 = vmatpush1.msra.mxu0 0.0
        %627 = vmatprep.subr.mxu0 0.0
        %628 = vmatpush1.msra.mxu0 0.0
        %629 = vmatprep.subr.mxu0 0.0
        %630 = vmatpush1.msra.mxu0 0.0
        %631 = vmatprep.subr.mxu0 0.0
        %632 = vmatpush1.msra.mxu0 0.0
        %633 = vmatprep.subr.mxu0 0.0
        %634 = vmatpush1.msra.mxu0 0.0
        %635 = vmatprep.subr.mxu0 0.0
        %636 = vmatpush1.msra.mxu0 0.0
        %637 = vmatprep.subr.mxu0 0.0
        %638 = vmatpush1.msra.mxu0 0.0
        %639 = vmatprep.subr.mxu0 0.0
        %640 = vmatpush1.msra.mxu0 0.0
        %641 = vmatprep.subr.mxu0 0.0
        %642 = vmatpush1.msra.mxu0 0.0
        %643 = vmatprep.subr.mxu0 0.0
        %644 = vmatpush1.msra.mxu0 0.0
        %645 = vmatprep.subr.mxu0 0.0
        %646 = vmatpush1.msra.mxu0 0.0
        %647 = vmatprep.subr.mxu0 0.0
        %648 = vmatpush1.msra.mxu0 0.0
        %649 = vmatprep.subr.mxu0 0.0
        %650 = vmatpush1.msra.mxu0 0.0
        %651 = vmatprep.subr.mxu0 0.0
        %652 = vmatpush1.msra.mxu0 0.0
        %653 = vmatprep.subr.mxu0 0.0
        %654 = vmatpush1.msra.mxu0 0.0
        %655 = vmatprep.mubr.f32.mxu0 0.0
        %656 = vmatmul.mubr.f32.gmra.mrb[0].mxu0 %v585
        %v657 = vpop.f32.mrb[0].mxu0
        %v658 = vadd.f32 %v581, %v657
        %v659 = vpop.f32.mrb[0].mxu0
        %660 = vdwg.mxu0
        %v663 = vunpack.c.l.s4 1983009808
        %v664 = vunpack.c.0.s8 %v663
        %v665 = vlaneseq
        %v666 = vshrl.u32 %v665, 7
        %v667 = vsub.s32 %v664, %v666
        %v668 = vrot.slane %v658, %v667
        %v669 = vcombine.high %v668, %v668
        %v670 = vld [vmem:[#allocation2] sm:$0xf]
        %v673 = vunpack.c.l.s4 1983009808
        %v674 = vunpack.c.0.s8 %v673
        %v675 = vlaneseq
        %v676 = vshrl.u32 %v675, 7
        %v677 = vsub.s32 %v674, %v676
        %v678 = vrot.slane %v670, %v677
        %v679 = vcombine.high %v678, %v678
        %v682 = vld [vmem:[#allocation3] sm:$0xf]
        %v685 = vunpack.c.l.s4 1983009808
        %v686 = vunpack.c.0.s8 %v685
        %v687 = vlaneseq
        %v688 = vshrl.u32 %v687, 7
        %v689 = vsub.s32 %v686, %v688
        %v690 = vrot.slane %v682, %v689
        %v691 = vcombine.high %v690, %v690
        %692 = vxpose.xlu0.b32.start [1/16] %v678, 128
        %693 = vxpose.xlu0.b32.cont [2/16] 0.0, 128
        %694 = vxpose.xlu0.b32.cont [3/16] 0.0, 128
        %695 = vxpose.xlu0.b32.cont [4/16] 0.0, 128
        %696 = vxpose.xlu0.b32.cont [5/16] 0.0, 128
        %697 = vxpose.xlu0.b32.cont [6/16] 0.0, 128
        %698 = vxpose.xlu0.b32.cont [7/16] 0.0, 128
        %699 = vxpose.xlu0.b32.cont [8/16] 0.0, 128
        %700 = vxpose.xlu0.b32.cont [9/16] 0.0, 128
        %701 = vxpose.xlu0.b32.cont [10/16] 0.0, 128
        %702 = vxpose.xlu0.b32.cont [11/16] 0.0, 128
        %703 = vxpose.xlu0.b32.cont [12/16] 0.0, 128
        %704 = vxpose.xlu0.b32.cont [13/16] 0.0, 128
        %705 = vxpose.xlu0.b32.cont [14/16] 0.0, 128
        %706 = vxpose.xlu0.b32.cont [15/16] 0.0, 128
        %707 = vxpose.xlu0.b32.end [16/16] 0.0, 128
        %v708 = vpop.trf.xlu0
        %v709 = vpop.trf.xlu0
        %v710 = vpop.trf.xlu0
        %v711 = vpop.trf.xlu0
        %v712 = vpop.trf.xlu0
        %v713 = vpop.trf.xlu0
        %v714 = vpop.trf.xlu0
        %v715 = vpop.trf.xlu0
        %v716 = vpop.trf.xlu0
        %v717 = vpop.trf.xlu0
        %v718 = vpop.trf.xlu0
        %v719 = vpop.trf.xlu0
        %v720 = vpop.trf.xlu0
        %v721 = vpop.trf.xlu0
        %v722 = vpop.trf.xlu0
        %v723 = vpop.trf.xlu0
        %vm724 = vcmask 15360
        %v726 = vsel %vm724, %v708, 0
        %vm728 = vcmask 1041408
        %v729 = vsel %vm728, %v668, 0
        %731 = vmatprep.subr.mxu0 0.0
        %732 = vmatpush1.msra.mxu0 %v729
        %733 = vmatprep.subr.mxu0 0.0
        %734 = vmatpush1.msra.mxu0 0.0
        %735 = vmatprep.subr.mxu0 0.0
        %736 = vmatpush1.msra.mxu0 0.0
        %737 = vmatprep.subr.mxu0 0.0
        %738 = vmatpush1.msra.mxu0 0.0
        %739 = vmatprep.subr.mxu0 0.0
        %740 = vmatpush1.msra.mxu0 0.0
        %741 = vmatprep.subr.mxu0 0.0
        %742 = vmatpush1.msra.mxu0 0.0
        %743 = vmatprep.subr.mxu0 0.0
        %744 = vmatpush1.msra.mxu0 0.0
        %745 = vmatprep.subr.mxu0 0.0
        %746 = vmatpush1.msra.mxu0 0.0
        %747 = vmatprep.subr.mxu0 0.0
        %748 = vmatpush1.msra.mxu0 0.0
        %749 = vmatprep.subr.mxu0 0.0
        %750 = vmatpush1.msra.mxu0 0.0
        %751 = vmatprep.subr.mxu0 0.0
        %752 = vmatpush1.msra.mxu0 0.0
        %753 = vmatprep.subr.mxu0 0.0
        %754 = vmatpush1.msra.mxu0 0.0
        %755 = vmatprep.subr.mxu0 0.0
        %756 = vmatpush1.msra.mxu0 0.0
        %757 = vmatprep.subr.mxu0 0.0
        %758 = vmatpush1.msra.mxu0 0.0
        %759 = vmatprep.subr.mxu0 0.0
        %760 = vmatpush1.msra.mxu0 0.0
        %761 = vmatprep.subr.mxu0 0.0
        %762 = vmatpush1.msra.mxu0 0.0
        %763 = vmatprep.subr.mxu0 0.0
        %764 = vmatpush1.msra.mxu0 0.0
        %765 = vmatprep.subr.mxu0 0.0
        %766 = vmatpush1.msra.mxu0 0.0
        %767 = vmatprep.subr.mxu0 0.0
        %768 = vmatpush1.msra.mxu0 0.0
        %769 = vmatprep.subr.mxu0 0.0
        %770 = vmatpush1.msra.mxu0 0.0
        %771 = vmatprep.subr.mxu0 0.0
        %772 = vmatpush1.msra.mxu0 0.0
        %773 = vmatprep.subr.mxu0 0.0
        %774 = vmatpush1.msra.mxu0 0.0
        %775 = vmatprep.subr.mxu0 0.0
        %776 = vmatpush1.msra.mxu0 0.0
        %777 = vmatprep.subr.mxu0 0.0
        %778 = vmatpush1.msra.mxu0 0.0
        %779 = vmatprep.subr.mxu0 0.0
        %780 = vmatpush1.msra.mxu0 0.0
        %781 = vmatprep.subr.mxu0 0.0
        %782 = vmatpush1.msra.mxu0 0.0
        %783 = vmatprep.subr.mxu0 0.0
        %784 = vmatpush1.msra.mxu0 0.0
        %785 = vmatprep.subr.mxu0 0.0
        %786 = vmatpush1.msra.mxu0 0.0
        %787 = vmatprep.subr.mxu0 0.0
        %788 = vmatpush1.msra.mxu0 0.0
        %789 = vmatprep.subr.mxu0 0.0
        %790 = vmatpush1.msra.mxu0 0.0
        %791 = vmatprep.subr.mxu0 0.0
        %792 = vmatpush1.msra.mxu0 0.0
        %793 = vmatprep.subr.mxu0 0.0
        %794 = vmatpush1.msra.mxu0 0.0
        %795 = vmatprep.mubr.f32.mxu0 0.0
        %796 = vmatmul.mubr.f32.gmra.mrb[0].mxu0 %v726
        %v797 = vpop.f32.mrb[0].mxu0
        %v798 = vadd.f32 0.0, %v797
        %v799 = vpop.f32.mrb[0].mxu0
        %800 = vdwg.mxu0
        %801 = vxpose.xlu0.b32.start [1/16] %v679, 128
        %802 = vxpose.xlu0.b32.cont [2/16] 0.0, 128
        %803 = vxpose.xlu0.b32.cont [3/16] 0.0, 128
        %804 = vxpose.xlu0.b32.cont [4/16] 0.0, 128
        %805 = vxpose.xlu0.b32.cont [5/16] 0.0, 128
        %806 = vxpose.xlu0.b32.cont [6/16] 0.0, 128
        %807 = vxpose.xlu0.b32.cont [7/16] 0.0, 128
        %808 = vxpose.xlu0.b32.cont [8/16] 0.0, 128
        %809 = vxpose.xlu0.b32.cont [9/16] 0.0, 128
        %810 = vxpose.xlu0.b32.cont [10/16] 0.0, 128
        %811 = vxpose.xlu0.b32.cont [11/16] 0.0, 128
        %812 = vxpose.xlu0.b32.cont [12/16] 0.0, 128
        %813 = vxpose.xlu0.b32.cont [13/16] 0.0, 128
        %814 = vxpose.xlu0.b32.cont [14/16] 0.0, 128
        %815 = vxpose.xlu0.b32.cont [15/16] 0.0, 128
        %816 = vxpose.xlu0.b32.end [16/16] 0.0, 128
        %v817 = vpop.trf.xlu0
        %v818 = vpop.trf.xlu0
        %v819 = vpop.trf.xlu0
        %v820 = vpop.trf.xlu0
        %v821 = vpop.trf.xlu0
        %v822 = vpop.trf.xlu0
        %v823 = vpop.trf.xlu0
        %v824 = vpop.trf.xlu0
        %v825 = vpop.trf.xlu0
        %v826 = vpop.trf.xlu0
        %v827 = vpop.trf.xlu0
        %v828 = vpop.trf.xlu0
        %v829 = vpop.trf.xlu0
        %v830 = vpop.trf.xlu0
        %v831 = vpop.trf.xlu0
        %v832 = vpop.trf.xlu0
        %v834 = vsel %vm724, %v817, 0
        %v836 = vsel %vm728, %v669, 0
        %838 = vmatprep.subr.mxu0 0.0
        %839 = vmatpush1.msra.mxu0 %v836
        %840 = vmatprep.subr.mxu0 0.0
        %841 = vmatpush1.msra.mxu0 0.0
        %842 = vmatprep.subr.mxu0 0.0
        %843 = vmatpush1.msra.mxu0 0.0
        %844 = vmatprep.subr.mxu0 0.0
        %845 = vmatpush1.msra.mxu0 0.0
        %846 = vmatprep.subr.mxu0 0.0
        %847 = vmatpush1.msra.mxu0 0.0
        %848 = vmatprep.subr.mxu0 0.0
        %849 = vmatpush1.msra.mxu0 0.0
        %850 = vmatprep.subr.mxu0 0.0
        %851 = vmatpush1.msra.mxu0 0.0
        %852 = vmatprep.subr.mxu0 0.0
        %853 = vmatpush1.msra.mxu0 0.0
        %854 = vmatprep.subr.mxu0 0.0
        %855 = vmatpush1.msra.mxu0 0.0
        %856 = vmatprep.subr.mxu0 0.0
        %857 = vmatpush1.msra.mxu0 0.0
        %858 = vmatprep.subr.mxu0 0.0
        %859 = vmatpush1.msra.mxu0 0.0
        %860 = vmatprep.subr.mxu0 0.0
        %861 = vmatpush1.msra.mxu0 0.0
        %862 = vmatprep.subr.mxu0 0.0
        %863 = vmatpush1.msra.mxu0 0.0
        %864 = vmatprep.subr.mxu0 0.0
        %865 = vmatpush1.msra.mxu0 0.0
        %866 = vmatprep.subr.mxu0 0.0
        %867 = vmatpush1.msra.mxu0 0.0
        %868 = vmatprep.subr.mxu0 0.0
        %869 = vmatpush1.msra.mxu0 0.0
        %870 = vmatprep.subr.mxu0 0.0
        %871 = vmatpush1.msra.mxu0 0.0
        %872 = vmatprep.subr.mxu0 0.0
        %873 = vmatpush1.msra.mxu0 0.0
        %874 = vmatprep.subr.mxu0 0.0
        %875 = vmatpush1.msra.mxu0 0.0
        %876 = vmatprep.subr.mxu0 0.0
        %877 = vmatpush1.msra.mxu0 0.0
        %878 = vmatprep.subr.mxu0 0.0
        %879 = vmatpush1.msra.mxu0 0.0
        %880 = vmatprep.subr.mxu0 0.0
        %881 = vmatpush1.msra.mxu0 0.0
        %882 = vmatprep.subr.mxu0 0.0
        %883 = vmatpush1.msra.mxu0 0.0
        %884 = vmatprep.subr.mxu0 0.0
        %885 = vmatpush1.msra.mxu0 0.0
        %886 = vmatprep.subr.mxu0 0.0
        %887 = vmatpush1.msra.mxu0 0.0
        %888 = vmatprep.subr.mxu0 0.0
        %889 = vmatpush1.msra.mxu0 0.0
        %890 = vmatprep.subr.mxu0 0.0
        %891 = vmatpush1.msra.mxu0 0.0
        %892 = vmatprep.subr.mxu0 0.0
        %893 = vmatpush1.msra.mxu0 0.0
        %894 = vmatprep.subr.mxu0 0.0
        %895 = vmatpush1.msra.mxu0 0.0
        %896 = vmatprep.subr.mxu0 0.0
        %897 = vmatpush1.msra.mxu0 0.0
        %898 = vmatprep.subr.mxu0 0.0
        %899 = vmatpush1.msra.mxu0 0.0
        %900 = vmatprep.subr.mxu0 0.0
        %901 = vmatpush1.msra.mxu0 0.0
        %902 = vmatprep.mubr.f32.mxu0 0.0
        %903 = vmatmul.mubr.f32.gmra.mrb[0].mxu0 %v834
        %v904 = vpop.f32.mrb[0].mxu0
        %v905 = vadd.f32 0.0, %v904
        %v906 = vpop.f32.mrb[0].mxu0
        %907 = vdwg.mxu0
        %v908 = vrot.slane %v798, 4
        %v909 = vmax.f32 %v798, %v908
        %v910 = vrot.slane %v909, 2
        %v911 = vmax.f32 %v909, %v910
        %v912 = vrot.slane %v911, 1
        %v913 = vmax.f32 %v911, %v912
        %v914 = vrot.slane %v905, 4
        %v915 = vmax.f32 %v905, %v914
        %v916 = vrot.slane %v915, 2
        %v917 = vmax.f32 %v915, %v916
        %v918 = vrot.slane %v917, 1
        %v919 = vmax.f32 %v917, %v918
        %v920 = vsub.f32 %v798, %v913
        %v921 = vsub.f32 %v905, %v919
        %v922 = vmul.f32 %v920, 1.442695
        %v923 = vpow.pop %v922
        %v924 = vmul.f32 %v921, 1.442695
        %v925 = vpow.pop %v924
        %v926 = vrot.slane %v923, 4
        %v927 = vadd.f32 %v923, %v926
        %v928 = vrot.slane %v927, 2
        %v929 = vadd.f32 %v927, %v928
        %v930 = vrot.slane %v929, 1
        %v931 = vadd.f32 %v929, %v930
        %v932 = vrot.slane %v925, 4
        %v933 = vadd.f32 %v925, %v932
        %v934 = vrot.slane %v933, 2
        %v935 = vadd.f32 %v933, %v934
        %v936 = vrot.slane %v935, 1
        %v937 = vadd.f32 %v935, %v936
        %v938 = vrcp.pop %v931
        %v939 = vrcp.pop %v937
        %v940 = vmul.f32 %v923, %v938
        %v941 = vmul.f32 %v925, %v939
        %vm942 = vcmask 64512
        %v943 = vsel %vm942, %v690, 0
        %945 = vmatprep.subr.mxu0 0.0
        %946 = vmatpush1.msra.mxu0 %v940
        %947 = vmatprep.subr.mxu0 0.0
        %948 = vmatpush1.msra.mxu0 0.0
        %949 = vmatprep.subr.mxu0 0.0
        %950 = vmatpush1.msra.mxu0 0.0
        %951 = vmatprep.subr.mxu0 0.0
        %952 = vmatpush1.msra.mxu0 0.0
        %953 = vmatprep.subr.mxu0 0.0
        %954 = vmatpush1.msra.mxu0 0.0
        %955 = vmatprep.subr.mxu0 0.0
        %956 = vmatpush1.msra.mxu0 0.0
        %957 = vmatprep.subr.mxu0 0.0
        %958 = vmatpush1.msra.mxu0 0.0
        %959 = vmatprep.subr.mxu0 0.0
        %960 = vmatpush1.msra.mxu0 0.0
        %961 = vmatprep.subr.mxu0 0.0
        %962 = vmatpush1.msra.mxu0 0.0
        %963 = vmatprep.subr.mxu0 0.0
        %964 = vmatpush1.msra.mxu0 0.0
        %965 = vmatprep.subr.mxu0 0.0
        %966 = vmatpush1.msra.mxu0 0.0
        %967 = vmatprep.subr.mxu0 0.0
        %968 = vmatpush1.msra.mxu0 0.0
        %969 = vmatprep.subr.mxu0 0.0
        %970 = vmatpush1.msra.mxu0 0.0
        %971 = vmatprep.subr.mxu0 0.0
        %972 = vmatpush1.msra.mxu0 0.0
        %973 = vmatprep.subr.mxu0 0.0
        %974 = vmatpush1.msra.mxu0 0.0
        %975 = vmatprep.subr.mxu0 0.0
        %976 = vmatpush1.msra.mxu0 0.0
        %977 = vmatprep.subr.mxu0 0.0
        %978 = vmatpush1.msra.mxu0 0.0
        %979 = vmatprep.subr.mxu0 0.0
        %980 = vmatpush1.msra.mxu0 0.0
        %981 = vmatprep.subr.mxu0 0.0
        %982 = vmatpush1.msra.mxu0 0.0
        %983 = vmatprep.subr.mxu0 0.0
        %984 = vmatpush1.msra.mxu0 0.0
        %985 = vmatprep.subr.mxu0 0.0
        %986 = vmatpush1.msra.mxu0 0.0
        %987 = vmatprep.subr.mxu0 0.0
        %988 = vmatpush1.msra.mxu0 0.0
        %989 = vmatprep.subr.mxu0 0.0
        %990 = vmatpush1.msra.mxu0 0.0
        %991 = vmatprep.subr.mxu0 0.0
        %992 = vmatpush1.msra.mxu0 0.0
        %993 = vmatprep.subr.mxu0 0.0
        %994 = vmatpush1.msra.mxu0 0.0
        %995 = vmatprep.subr.mxu0 0.0
        %996 = vmatpush1.msra.mxu0 0.0
        %997 = vmatprep.subr.mxu0 0.0
        %998 = vmatpush1.msra.mxu0 0.0
        %999 = vmatprep.subr.mxu0 0.0
        %1000 = vmatpush1.msra.mxu0 0.0
        %1001 = vmatprep.subr.mxu0 0.0
        %1002 = vmatpush1.msra.mxu0 0.0
        %1003 = vmatprep.subr.mxu0 0.0
        %1004 = vmatpush1.msra.mxu0 0.0
        %1005 = vmatprep.subr.mxu0 0.0
        %1006 = vmatpush1.msra.mxu0 0.0
        %1007 = vmatprep.subr.mxu0 0.0
        %1008 = vmatpush1.msra.mxu0 0.0
        %1009 = vmatprep.mubr.f32.mxu0 0.0
        %1010 = vmatmul.mubr.f32.gmra.mrb[0].mxu0 %v943
        %v1011 = vpop.f32.mrb[0].mxu0
        %v1012 = vadd.f32 0.0, %v1011
        %v1013 = vpop.f32.mrb[0].mxu0
        %1014 = vdwg.mxu0
        %v1015 = vsel %vm942, %v691, 0
        %1017 = vmatprep.subr.mxu0 0.0
        %1018 = vmatpush1.msra.mxu0 %v941
        %1019 = vmatprep.subr.mxu0 0.0
        %1020 = vmatpush1.msra.mxu0 0.0
        %1021 = vmatprep.subr.mxu0 0.0
        %1022 = vmatpush1.msra.mxu0 0.0
        %1023 = vmatprep.subr.mxu0 0.0
        %1024 = vmatpush1.msra.mxu0 0.0
        %1025 = vmatprep.subr.mxu0 0.0
        %1026 = vmatpush1.msra.mxu0 0.0
        %1027 = vmatprep.subr.mxu0 0.0
        %1028 = vmatpush1.msra.mxu0 0.0
        %1029 = vmatprep.subr.mxu0 0.0
        %1030 = vmatpush1.msra.mxu0 0.0
        %1031 = vmatprep.subr.mxu0 0.0
        %1032 = vmatpush1.msra.mxu0 0.0
        %1033 = vmatprep.subr.mxu0 0.0
        %1034 = vmatpush1.msra.mxu0 0.0
        %1035 = vmatprep.subr.mxu0 0.0
        %1036 = vmatpush1.msra.mxu0 0.0
        %1037 = vmatprep.subr.mxu0 0.0
        %1038 = vmatpush1.msra.mxu0 0.0
        %1039 = vmatprep.subr.mxu0 0.0
        %1040 = vmatpush1.msra.mxu0 0.0
        %1041 = vmatprep.subr.mxu0 0.0
        %1042 = vmatpush1.msra.mxu0 0.0
        %1043 = vmatprep.subr.mxu0 0.0
        %1044 = vmatpush1.msra.mxu0 0.0
        %1045 = vmatprep.subr.mxu0 0.0
        %1046 = vmatpush1.msra.mxu0 0.0
        %1047 = vmatprep.subr.mxu0 0.0
        %1048 = vmatpush1.msra.mxu0 0.0
        %1049 = vmatprep.subr.mxu0 0.0
        %1050 = vmatpush1.msra.mxu0 0.0
        %1051 = vmatprep.subr.mxu0 0.0
        %1052 = vmatpush1.msra.mxu0 0.0
        %1053 = vmatprep.subr.mxu0 0.0
        %1054 = vmatpush1.msra.mxu0 0.0
        %1055 = vmatprep.subr.mxu0 0.0
        %1056 = vmatpush1.msra.mxu0 0.0
        %1057 = vmatprep.subr.mxu0 0.0
        %1058 = vmatpush1.msra.mxu0 0.0
        %1059 = vmatprep.subr.mxu0 0.0
        %1060 = vmatpush1.msra.mxu0 0.0
        %1061 = vmatprep.subr.mxu0 0.0
        %1062 = vmatpush1.msra.mxu0 0.0
        %1063 = vmatprep.subr.mxu0 0.0
        %1064 = vmatpush1.msra.mxu0 0.0
        %1065 = vmatprep.subr.mxu0 0.0
        %1066 = vmatpush1.msra.mxu0 0.0
        %1067 = vmatprep.subr.mxu0 0.0
        %1068 = vmatpush1.msra.mxu0 0.0
        %1069 = vmatprep.subr.mxu0 0.0
        %1070 = vmatpush1.msra.mxu0 0.0
        %1071 = vmatprep.subr.mxu0 0.0
        %1072 = vmatpush1.msra.mxu0 0.0
        %1073 = vmatprep.subr.mxu0 0.0
        %1074 = vmatpush1.msra.mxu0 0.0
        %1075 = vmatprep.subr.mxu0 0.0
        %1076 = vmatpush1.msra.mxu0 0.0
        %1077 = vmatprep.subr.mxu0 0.0
        %1078 = vmatpush1.msra.mxu0 0.0
        %1079 = vmatprep.subr.mxu0 0.0
        %1080 = vmatpush1.msra.mxu0 0.0
        %1081 = vmatprep.mubr.f32.mxu0 0.0
        %1082 = vmatmul.mubr.f32.gmra.mrb[0].mxu0 %v1015
        %v1083 = vpop.f32.mrb[0].mxu0
        %v1084 = vadd.f32 0.0, %v1083
        %v1085 = vpop.f32.mrb[0].mxu0
        %1086 = vdwg.mxu0
        %v1087 = vld [vmem:[%s8] sm:$0xf]
        %v1088 = vld [vmem:[%s9] sm:$0xf]
        %1090 = vset.pattern.permute.xlu0 0
        %1091 = vperm.xlu0 %1090, %v1088
        %v1092 = vpop.permute.xlu0 %1091
        %v1096 = vcombine.low %v1012, %v1084
        %v1098 = vunpack.c.l.s4 1983009808
        %v1099 = vunpack.c.0.s8 %v1098
        %v1100 = vlaneseq
        %v1101 = vshrl.u32 %v1100, 7
        %v1102 = vsub.s32 %v1099, %v1101
        %v1103 = vrot.slane %v1096, %v1102
        %v1105 = vsel %vm583, %v1087, 0
        %v1107 = vsel %vm587, %v1103, 0
        %1109 = vmatprep.subr.mxu0 0.0
        %1110 = vmatpush1.msra.mxu0 %v1107
        %1111 = vmatprep.subr.mxu0 0.0
        %1112 = vmatpush1.msra.mxu0 0.0
        %1113 = vmatprep.subr.mxu0 0.0
        %1114 = vmatpush1.msra.mxu0 0.0
        %1115 = vmatprep.subr.mxu0 0.0
        %1116 = vmatpush1.msra.mxu0 0.0
        %1117 = vmatprep.subr.mxu0 0.0
        %1118 = vmatpush1.msra.mxu0 0.0
        %1119 = vmatprep.subr.mxu0 0.0
        %1120 = vmatpush1.msra.mxu0 0.0
        %1121 = vmatprep.subr.mxu0 0.0
        %1122 = vmatpush1.msra.mxu0 0.0
        %1123 = vmatprep.subr.mxu0 0.0
        %1124 = vmatpush1.msra.mxu0 0.0
        %1125 = vmatprep.subr.mxu0 0.0
        %1126 = vmatpush1.msra.mxu0 0.0
        %1127 = vmatprep.subr.mxu0 0.0
        %1128 = vmatpush1.msra.mxu0 0.0
        %1129 = vmatprep.subr.mxu0 0.0
        %1130 = vmatpush1.msra.mxu0 0.0
        %1131 = vmatprep.subr.mxu0 0.0
        %1132 = vmatpush1.msra.mxu0 0.0
        %1133 = vmatprep.subr.mxu0 0.0
        %1134 = vmatpush1.msra.mxu0 0.0
        %1135 = vmatprep.subr.mxu0 0.0
        %1136 = vmatpush1.msra.mxu0 0.0
        %1137 = vmatprep.subr.mxu0 0.0
        %1138 = vmatpush1.msra.mxu0 0.0
        %1139 = vmatprep.subr.mxu0 0.0
        %1140 = vmatpush1.msra.mxu0 0.0
        %1141 = vmatprep.subr.mxu0 0.0
        %1142 = vmatpush1.msra.mxu0 0.0
        %1143 = vmatprep.subr.mxu0 0.0
        %1144 = vmatpush1.msra.mxu0 0.0
        %1145 = vmatprep.subr.mxu0 0.0
        %1146 = vmatpush1.msra.mxu0 0.0
        %1147 = vmatprep.subr.mxu0 0.0
        %1148 = vmatpush1.msra.mxu0 0.0
        %1149 = vmatprep.subr.mxu0 0.0
        %1150 = vmatpush1.msra.mxu0 0.0
        %1151 = vmatprep.subr.mxu0 0.0
        %1152 = vmatpush1.msra.mxu0 0.0
        %1153 = vmatprep.subr.mxu0 0.0
        %1154 = vmatpush1.msra.mxu0 0.0
        %1155 = vmatprep.subr.mxu0 0.0
        %1156 = vmatpush1.msra.mxu0 0.0
        %1157 = vmatprep.subr.mxu0 0.0
        %1158 = vmatpush1.msra.mxu0 0.0
        %1159 = vmatprep.subr.mxu0 0.0
        %1160 = vmatpush1.msra.mxu0 0.0
        %1161 = vmatprep.subr.mxu0 0.0
        %1162 = vmatpush1.msra.mxu0 0.0
        %1163 = vmatprep.subr.mxu0 0.0
        %1164 = vmatpush1.msra.mxu0 0.0
        %1165 = vmatprep.subr.mxu0 0.0
        %1166 = vmatpush1.msra.mxu0 0.0
        %1167 = vmatprep.subr.mxu0 0.0
        %1168 = vmatpush1.msra.mxu0 0.0
        %1169 = vmatprep.subr.mxu0 0.0
        %1170 = vmatpush1.msra.mxu0 0.0
        %1171 = vmatprep.subr.mxu0 0.0
        %1172 = vmatpush1.msra.mxu0 0.0
        %1173 = vmatprep.mubr.f32.mxu0 0.0
        %1174 = vmatmul.mubr.f32.gmra.mrb[0].mxu0 %v1105
        %v1175 = vpop.f32.mrb[0].mxu0
        %v1176 = vadd.f32 %v1092, %v1175
        %v1177 = vpop.f32.mrb[0].mxu0
        %1178 = vdwg.mxu0
        %1179 = vst [vmem:[%s389] sm:$0xf] %v1176
        %s1180 = sand.u32 %s268, 1
        %s1181 = scalar_lea.sflag [#allocation5], %s1180
        %s1182 = sand.u32 %s268, 1
        %s1183 = smul.addr %s1182, 4
        %s1184 = scalar_lea.vmem [#allocation4], %s1183
        // Predicated region
        $region65: #{tpu_custom_call.1} parent=59 // pred_check
          %p1185 = pneg %p278
        $region66: #{tpu_custom_call.1} parent=59 // pred_check_branch
          %1187 = sbr.rel (%p1185) target = $region68
        $region67: #{tpu_custom_call.1} parent=59 // pred_region
          %s1189 = ssub.s32 64, 64
          %1190 = vsyncadd %s1181, %s1189
          %s1191 = smul.addr %s28, 2
          %s1192 = sadd.s32 %s29, %s1191
          %s1193 = smul.addr %s1192, 64
          %s1194 = scalar_lea.hbm %s10, %s1193
          %s1196 = sshll.u32 %s1184, 4
          %s1197 = int_to_ptr.vmem [resolvable:$true] %s1196
          %1199 = dma.vmem_to_hbm [thread:$0]  %s1197, 64, %s1194, %s1181
        $region68: #{tpu_custom_call.1} parent=59 // pred_fallthru
          _
      $region60: #{tpu_custom_call.1} parent=5 // pred_fallthru
        _
      %p1200 = scmp.le.s32.totalorder 2, %s19
      // Predicated region
      $region69: #{tpu_custom_call.1} parent=5 // pred_check
        %p1201 = pneg %p1200
      $region70: #{tpu_custom_call.1} parent=5 // pred_check_branch
        %1203 = sbr.rel (%p1201) target = $region72
      $region71: #{tpu_custom_call.1} parent=5 // pred_region
        %s1204 = ssub.s32 %s19, 2
        // Predicated region
        $region73: #{tpu_custom_call.1} parent=71 // pred_check
          %p1205 = pneg %p284
        $region74: #{tpu_custom_call.1} parent=71 // pred_check_branch
          %1207 = sbr.rel (%p1205) target = $region76
        $region75: #{tpu_custom_call.1} parent=71 // pred_region
          %s1208 = sand.u32 %s269, 1
          %s1209 = scalar_lea.sflag [#allocation5], %s1208
          %s1210 = sand.u32 %s269, 1
          %s1211 = smul.addr %s1210, 4
          %s1212 = scalar_lea.vmem [#allocation4], %s1211
          %1213 = dma.done %s1209, 64
        $region76: #{tpu_custom_call.1} parent=71 // pred_fallthru
          _
      $region72: #{tpu_custom_call.1} parent=5 // pred_fallthru
        _
    $region6: #{tpu_custom_call.1} parent=1 // loop_footer
      %s23 = sadd.s32 1, %s19
    $region7: #{tpu_custom_call.1} parent=1 // loop_footer_branch
      %18 = sbr.rel target = $region3
    $region8: #{tpu_custom_call.1} parent=1 // loop_exit
      _
    %1214 = vsyncpa [#allocation5], 1
    %s1215 = scalar_lea.sflag [#allocation5], 1
    %1216 = vsyncpa %s1215, 1

</llo_original>
